<compile_context>
chip_gen: v7x
topology: tpu7x:2x2x1
jax: 0.10.0
libtpu: 0.0.40
codegen_flags: <defaults>
</compile_context>

<pallas_src>
import functools

import jax
import jax.numpy as jnp
from jax.experimental import pallas as pl
from jax.experimental.pallas import tpu as pltpu


def prior_disc_kernel(x_ref, w0_ref, b0_ref, w1_ref, b1_ref, w2_ref, b2_ref,
                      o_ref):
    # ---- layer 0: Linear(Dp, Dp) + ReLU (f32 accumulation on the MXU) ----
    h = jnp.dot(x_ref[...], w0_ref[...], preferred_element_type=jnp.float32)
    h = jnp.maximum(h + b0_ref[...], 0.0)

    # ---- layer 1: Linear(Dp, Dp) + ReLU ----
    h = jnp.dot(h.astype(w1_ref.dtype), w1_ref[...],
                preferred_element_type=jnp.float32)
    h = jnp.maximum(h + b1_ref[...], 0.0)

    # ---- layer 2: Linear(Dp, 1) + sigmoid, computed lane-major ----
    # (1, Dp) @ (Dp, tile_n) -> (1, tile_n): the logits come out lane-dense so the
    # output store is a full-width vst rather than 1-lane masked stores.
    logit = jnp.dot(w2_ref[...], h.T, preferred_element_type=jnp.float32)
    logit = logit + b2_ref[0]                       # scalar bias from SMEM
    o_ref[...] = jax.nn.sigmoid(logit)[None, :, :]  # (1, 1, tile_n) block


@functools.partial(jax.jit, static_argnames=("tile_n", "use_bf16"))
def prior_discriminator(x, w0, b0, w1, b1, w2, b2, *, tile_n=512,
                        use_bf16=False):
    """x: (N, D) f32.  Returns (N, 1) f32 = sigmoid(l2(relu(l1(relu(l0(x))))))."""
    N, D = x.shape
    Dp = ((D + 127) // 128) * 128                 # feature dim padded to lane width
    N_pad = ((N + tile_n - 1) // tile_n) * tile_n  # rows padded to the row tile
    num_tiles = N_pad // tile_n

    comp_dtype = jnp.bfloat16 if use_bf16 else jnp.float32

    # Zero-padding is exact: padded feature columns have zero weights/bias, padded
    # rows are sliced off the output below.
    x_p = jnp.pad(x, ((0, N_pad - N), (0, Dp - D))).astype(comp_dtype)
    w0_p = jnp.pad(w0, ((0, Dp - D), (0, Dp - D))).astype(comp_dtype)
    w1_p = jnp.pad(w1, ((0, Dp - D), (0, Dp - D))).astype(comp_dtype)
    b0_p = jnp.pad(b0, ((0, 0), (0, Dp - D)))                    # f32
    b1_p = jnp.pad(b1, ((0, 0), (0, Dp - D)))                    # f32
    w2_row = jnp.pad(w2.reshape(1, D), ((0, 0), (0, Dp - D)))    # (1, Dp) f32
    b2_s = b2.reshape((1,))                                      # scalar -> SMEM

    rep2 = lambda i: (0, 0)   # grid-invariant (weights / biases)

    out = pl.pallas_call(
        prior_disc_kernel,
        out_shape=jax.ShapeDtypeStruct((num_tiles, 1, tile_n), jnp.float32),
        grid=(num_tiles,),
        in_specs=[
            pl.BlockSpec((tile_n, Dp), lambda i: (i, 0)),              # x rows
            pl.BlockSpec((Dp, Dp), rep2),                              # w0
            pl.BlockSpec((1, Dp), rep2),                               # b0
            pl.BlockSpec((Dp, Dp), rep2),                              # w1
            pl.BlockSpec((1, Dp), rep2),                               # b1
            pl.BlockSpec((1, Dp), rep2),                               # w2 row
            pl.BlockSpec(memory_space=pltpu.MemorySpace.SMEM),         # b2 scalar
        ],
        out_specs=pl.BlockSpec((1, 1, tile_n), lambda i: (i, 0, 0)),   # lane-dense
        compiler_params=pltpu.CompilerParams(
            dimension_semantics=("parallel",)),
    )(x_p, w0_p, b0_p, w1_p, b1_p, w2_row, b2_s)

    # (num_tiles, 1, tile_n) -> (N_pad, 1) -> (N, 1)
    return out.reshape(N_pad, 1)[:N]


def init_params(key, input_dim):
    """Deterministic init matching nn.Linear shapes (uniform +-1/sqrt(fan_in)).

    Weights are returned already transposed to (in, out) layout."""
    ks = jax.random.split(key, 6)

    def lin(kw, kb, fan_in, fan_out):
        bound = 1.0 / jnp.sqrt(fan_in)
        w = jax.random.uniform(kw, (fan_in, fan_out), jnp.float32, -bound, bound)
        b = jax.random.uniform(kb, (1, fan_out), jnp.float32, -bound, bound)
        return w, b

    w0, b0 = lin(ks[0], ks[1], input_dim, input_dim)
    w1, b1 = lin(ks[2], ks[3], input_dim, input_dim)
    w2, b2 = lin(ks[4], ks[5], input_dim, 1)
    return w0, b0, w1, b1, w2, b2


def reference(x, w0, b0, w1, b1, w2, b2):
    hp = jax.lax.Precision.HIGHEST
    h = jnp.maximum(jnp.dot(x, w0, precision=hp) + b0, 0.0)
    h = jnp.maximum(jnp.dot(h, w1, precision=hp) + b1, 0.0)
    return jax.nn.sigmoid(jnp.dot(h, w2, precision=hp) + b2)


if __name__ == "__main__":
    key = jax.random.PRNGKey(0)
    k_x, k_p = jax.random.split(key)

    # Small but non-trivial: D=96 exercises feature padding (96 -> 128) and
    # N=1000 exercises row padding (1000 -> 1024) with a 2-step "parallel" grid.
    N, D = 1000, 96
    x = jax.random.uniform(k_x, (N, D), jnp.float32)   # InfoGraph feeds U(0,1) prior
    params = init_params(k_p, D)

    out = prior_discriminator(x, *params, tile_n=512, use_bf16=False)
    out = jax.block_until_ready(out)

    ref = reference(x, *params)
    assert out.shape == (N, 1)
    assert jnp.allclose(out, ref, atol=2e-5, rtol=2e-5), \
        float(jnp.max(jnp.abs(out - ref)))

    print("KERNEL_OK")
</pallas_src>

<mosaic_0001>
module attributes {stable_mosaic.version = 11 : i64} {
  func.func @prior_disc_kernel(%arg0: i32, %arg1: memref<512x128xf32, #tpu.memory_space<vmem>>, %arg2: memref<128x128xf32, #tpu.memory_space<vmem>>, %arg3: memref<1x128xf32, #tpu.memory_space<vmem>>, %arg4: memref<128x128xf32, #tpu.memory_space<vmem>>, %arg5: memref<1x128xf32, #tpu.memory_space<vmem>>, %arg6: memref<1x128xf32, #tpu.memory_space<vmem>>, %arg7: memref<1xf32, #tpu.memory_space<smem>>, %arg8: memref<1x1x512xf32, #tpu.memory_space<vmem>>) attributes {dimension_semantics = [#tpu.dimension_semantics<parallel>], iteration_bounds = array<i64: 2>, scalar_prefetch = 0 : i64, scratch_operands = 0 : i64, tpu.core_type = #tpu.core_type<tc>, window_params = [{transform_indices = @transform_0, window_bounds = array<i64: 512, 128>}, {pipeline_mode = #tpu.pipeline_mode<synchronous>, transform_indices = @transform_1, window_bounds = array<i64: 128, 128>}, {pipeline_mode = #tpu.pipeline_mode<synchronous>, transform_indices = @transform_2, window_bounds = array<i64: 1, 128>}, {pipeline_mode = #tpu.pipeline_mode<synchronous>, transform_indices = @transform_3, window_bounds = array<i64: 128, 128>}, {pipeline_mode = #tpu.pipeline_mode<synchronous>, transform_indices = @transform_4, window_bounds = array<i64: 1, 128>}, {pipeline_mode = #tpu.pipeline_mode<synchronous>, transform_indices = @transform_5, window_bounds = array<i64: 1, 128>}, {transform_indices = @transform_6, window_bounds = array<i64: 1>}, {transform_indices = @transform_7, window_bounds = array<i64: 1, 1, 512>}]} {
    %c0 = arith.constant 0 : index
    %c0_0 = arith.constant 0 : index
    %0 = vector.load %arg1[%c0, %c0_0] : memref<512x128xf32, #tpu.memory_space<vmem>>, vector<512x128xf32>
    %c0_1 = arith.constant 0 : index
    %c0_2 = arith.constant 0 : index
    %1 = vector.load %arg2[%c0_1, %c0_2] : memref<128x128xf32, #tpu.memory_space<vmem>>, vector<128x128xf32>
    %cst = arith.constant dense<0.000000e+00> : vector<512x128xf32>
    %2 = tpu.matmul %0, %1, %cst {dimension_numbers = #tpu.dot_dimension_numbers<[1], [0], [0], [1], [0, 0, 1, 1], [], []>} : vector<512x128xf32>, vector<128x128xf32>, vector<512x128xf32> -> vector<512x128xf32>
    %c0_3 = arith.constant 0 : index
    %c0_4 = arith.constant 0 : index
    %3 = vector.load %arg3[%c0_3, %c0_4] : memref<1x128xf32, #tpu.memory_space<vmem>>, vector<1x128xf32>
    %4 = vector.broadcast %3 : vector<1x128xf32> to vector<512x128xf32>
    %5 = arith.addf %2, %4 : vector<512x128xf32>
    %cst_5 = arith.constant 0.000000e+00 : f32
    %6 = vector.broadcast %cst_5 : f32 to vector<512x128xf32>
    %7 = arith.maximumf %5, %6 : vector<512x128xf32>
    %c0_6 = arith.constant 0 : index
    %c0_7 = arith.constant 0 : index
    %8 = vector.load %arg4[%c0_6, %c0_7] : memref<128x128xf32, #tpu.memory_space<vmem>>, vector<128x128xf32>
    %cst_8 = arith.constant dense<0.000000e+00> : vector<512x128xf32>
    %9 = tpu.matmul %7, %8, %cst_8 {dimension_numbers = #tpu.dot_dimension_numbers<[1], [0], [0], [1], [0, 0, 1, 1], [], []>} : vector<512x128xf32>, vector<128x128xf32>, vector<512x128xf32> -> vector<512x128xf32>
    %c0_9 = arith.constant 0 : index
    %c0_10 = arith.constant 0 : index
    %10 = vector.load %arg5[%c0_9, %c0_10] : memref<1x128xf32, #tpu.memory_space<vmem>>, vector<1x128xf32>
    %11 = vector.broadcast %10 : vector<1x128xf32> to vector<512x128xf32>
    %12 = arith.addf %9, %11 : vector<512x128xf32>
    %cst_11 = arith.constant 0.000000e+00 : f32
    %13 = vector.broadcast %cst_11 : f32 to vector<512x128xf32>
    %14 = arith.maximumf %12, %13 : vector<512x128xf32>
    %c0_12 = arith.constant 0 : index
    %c0_13 = arith.constant 0 : index
    %15 = vector.load %arg6[%c0_12, %c0_13] : memref<1x128xf32, #tpu.memory_space<vmem>>, vector<1x128xf32>
    %16 = tpu.transpose %14, [1, 0] : vector<512x128xf32> -> vector<128x512xf32>
    %cst_14 = arith.constant dense<0.000000e+00> : vector<1x512xf32>
    %17 = tpu.matmul %15, %16, %cst_14 {dimension_numbers = #tpu.dot_dimension_numbers<[1], [0], [0], [1], [0, 0, 1, 1], [], []>} : vector<1x128xf32>, vector<128x512xf32>, vector<1x512xf32> -> vector<1x512xf32>
    %c0_15 = arith.constant 0 : index
    %18 = memref.load %arg7[%c0_15] : memref<1xf32, #tpu.memory_space<smem>>
    %19 = vector.broadcast %18 : f32 to vector<1x512xf32>
    %20 = arith.addf %17, %19 : vector<1x512xf32>
    %21 = arith.negf %20 : vector<1x512xf32>
    %22 = math.exp %21 : vector<1x512xf32>
    %cst_16 = arith.constant 1.000000e+00 : f32
    %23 = vector.broadcast %cst_16 : f32 to vector<1x512xf32>
    %24 = arith.addf %23, %22 : vector<1x512xf32>
    %25 = arith.divf %23, %24 : vector<1x512xf32>
    %26 = vector.shape_cast %25 : vector<1x512xf32> to vector<1x1x512xf32>
    %c0_17 = arith.constant 0 : index
    %c0_18 = arith.constant 0 : index
    %c0_19 = arith.constant 0 : index
    %27 = vector.load %arg8[%c0_17, %c0_18, %c0_19] : memref<1x1x512xf32, #tpu.memory_space<vmem>>, vector<1x1x512xf32>
    tpu.vector_store %arg8[%c0_17, %c0_18, %c0_19], %26 {strides = array<i32>} : memref<1x1x512xf32, #tpu.memory_space<vmem>>, vector<1x1x512xf32>,
    return
  }
  func.func @transform_0(%arg0: i32) -> (i32, i32) {
    %c0_i32 = arith.constant 0 : i32
    %c0_i32_0 = arith.constant 0 : i32
    return %arg0, %c0_i32 : i32, i32
  }
  func.func @transform_1(%arg0: i32) -> (i32, i32) {
    %c0_i32 = arith.constant 0 : i32
    %c0_i32_0 = arith.constant 0 : i32
    %c0_i32_1 = arith.constant 0 : i32
    return %c0_i32, %c0_i32_0 : i32, i32
  }
  func.func @transform_2(%arg0: i32) -> (i32, i32) {
    %c0_i32 = arith.constant 0 : i32
    %c0_i32_0 = arith.constant 0 : i32
    %c0_i32_1 = arith.constant 0 : i32
    return %c0_i32, %c0_i32_0 : i32, i32
  }
  func.func @transform_3(%arg0: i32) -> (i32, i32) {
    %c0_i32 = arith.constant 0 : i32
    %c0_i32_0 = arith.constant 0 : i32
    %c0_i32_1 = arith.constant 0 : i32
    return %c0_i32, %c0_i32_0 : i32, i32
  }
  func.func @transform_4(%arg0: i32) -> (i32, i32) {
    %c0_i32 = arith.constant 0 : i32
    %c0_i32_0 = arith.constant 0 : i32
    %c0_i32_1 = arith.constant 0 : i32
    return %c0_i32, %c0_i32_0 : i32, i32
  }
  func.func @transform_5(%arg0: i32) -> (i32, i32) {
    %c0_i32 = arith.constant 0 : i32
    %c0_i32_0 = arith.constant 0 : i32
    %c0_i32_1 = arith.constant 0 : i32
    return %c0_i32, %c0_i32_0 : i32, i32
  }
  func.func @transform_6(%arg0: i32) -> i32 {
    %c0_i32 = arith.constant 0 : i32
    %c0_i32_0 = arith.constant 0 : i32
    return %c0_i32 : i32
  }
  func.func @transform_7(%arg0: i32) -> (i32, i32, i32) {
    %c0_i32 = arith.constant 0 : i32
    %c0_i32_0 = arith.constant 0 : i32
    %c0_i32_1 = arith.constant 0 : i32
    return %arg0, %c0_i32, %c0_i32_0 : i32, i32, i32
  }
}

</mosaic_0001>

<llo_original>
// kernel: prior_discriminator.1
$region0: #{prior_discriminator.1}
  #allocation0 [shape = 'u32[]', space=smem, size = 0x4, offset = 0x4, fixed_abs, tag = 'smem constant byte address 0x4 - core index']
  #allocation1 [shape = 'u32[144,128]{1,0:T(1,128)}', space=vmem, size = 0x12000, scoped, tag = 'internal scratch']
  #allocation2 [shape = 'f32[1]{0:T(128)S(6)}', space=smem, size = 0x200, scoped, tag = 'scoped memory for prior_discriminator.1']
  %s0 = inlined_call_operand.vmem [shape: f32[1024,128], index: 0, kind: input, shape index: {}]
  %s1 = inlined_call_operand.vmem [shape: f32[128,128], index: 1, kind: input, shape index: {}]
  %s2 = inlined_call_operand.vmem [shape: f32[1,128], index: 2, kind: input, shape index: {}]
  %s3 = inlined_call_operand.vmem [shape: f32[128,128], index: 3, kind: input, shape index: {}]
  %s4 = inlined_call_operand.vmem [shape: f32[1,128], index: 4, kind: input, shape index: {}]
  %s5 = inlined_call_operand.vmem [shape: f32[1,128], index: 5, kind: input, shape index: {}]
  %s6 = inlined_call_operand.<no memory space> [shape: f32[1], index: 6, kind: input, shape index: {}]
  %s7 = inlined_call_operand.hbm [shape: f32[2,1,512], index: 7, kind: output, shape index: {}]
  %s8 = sld [smem:[#allocation0]]
  $region61: #{prior_discriminator.1} parent=0
    _
  %s10 = ssub.s32 1, %s8
  %s11 = scalar_select 0, %s10, %s8
  %12 = sst [smem:[#allocation2]] %s6
  $region1: #{prior_discriminator.1} parent=0
    #allocation3 [shape = 'u8[4096]{0}', space=vmem, size = 0x1000, scoped, tag = 'output window, operand 0']
    #allocation4 [shape = 's32[2]{0}', space=sflag, size = 0x8, scoped, tag = 'scoped memory for prior_discriminator.1']
    %13 = vsyncpa [#allocation4], 0
    %s14 = scalar_lea.sflag [#allocation4], 1
    %15 = vsyncpa %s14, 0
    loop: start=0, step=1, limit=4
    $region2: #{prior_discriminator.1} parent=1 // loop_pre_header
      _
    $region3: #{prior_discriminator.1} parent=1 // loop_header
      %s17 = sphi 0, %s21
      %p18 = scmp.ge.s32.totalorder %s17, 4
      %s27 = sphi 0, %s29
      %s30 = sphi 0, %s27
      %s31 = sphi 0, %s30
      %s47 = sphi 0, %s31
      %s51 = sphi 0, %s51
      %s53 = sphi 0, %s51
      %s54 = sphi 0, %s53
      %s68 = sphi 0, %s54
      %s72 = sphi 0, %s72
      %s74 = sphi 0, %s72
      %s75 = sphi 0, %s74
      %s89 = sphi 0, %s75
      %s93 = sphi 0, %s93
      %s95 = sphi 0, %s93
      %s96 = sphi 0, %s95
      %s110 = sphi 0, %s96
      %s114 = sphi 0, %s114
      %s116 = sphi 0, %s114
      %s117 = sphi 0, %s116
      %s131 = sphi 0, %s117
      %s135 = sphi 0, %s135
      %s137 = sphi 0, %s135
      %s138 = sphi 0, %s137
      %s152 = sphi 0, %s138
      %s156 = sphi 0, %s156
      %s158 = sphi 0, %s156
      %s159 = sphi 0, %s158
      %s173 = sphi 0, %s159
      %s179 = sphi 0, %s181
      %s182 = sphi 0, %s179
      %s183 = sphi 0, %s182
      %s199 = sphi 0, %s183
    $region4: #{prior_discriminator.1} parent=1 // loop_header_branch
      %20 = sbr.rel (%p18) target = $region8
    $region5: #{prior_discriminator.1} parent=1 // loop_body
      %s22 = ssub.s32 %s17, 1
      %s23 = ssub.s32 %s17, 2
      %s24 = sadd.s32 %s17, 1
      %s25 = ssub.s32 %s17, %s24
      %p26 = scmp.eq.s32.totalorder %s25, 0
      %s28 = sadd.s32 %s27, 1
      %s29 = scalar_select %p26, %s27, %s28
      %p32 = pneg %p26
      %p33 = scmp.eq.s32.totalorder %s17, 1
      %p34 = por %p32, %p33
      %p35 = scmp.ne.s32.totalorder %s27, %s30
      %p36 = scmp.eq.s32.totalorder %s17, 0
      %p37 = por %p35, %p36
      %p38 = scmp.ne.s32.totalorder %s27, %s30
      %p39 = scmp.eq.s32.totalorder %s22, 1
      %p40 = por %p38, %p39
      %p41 = scmp.ne.s32.totalorder %s30, %s31
      %p42 = scmp.eq.s32.totalorder %s22, 0
      %p43 = por %p41, %p42
      %p44 = scmp.ne.s32.totalorder %s30, %s31
      %p45 = scmp.eq.s32.totalorder %s23, 1
      %p46 = por %p44, %p45
      %p48 = scmp.ne.s32.totalorder %s31, %s47
      %p49 = scmp.eq.s32.totalorder %s23, 0
      %p50 = por %p48, %p49
      %s52 = sadd.s32 %s51, 1
      %p55 = scmp.eq.s32.totalorder %s17, 1
      %p56 = scmp.ne.s32.totalorder %s51, %s53
      %p57 = scmp.eq.s32.totalorder %s17, 0
      %p58 = por %p56, %p57
      %p59 = scmp.ne.s32.totalorder %s51, %s53
      %p60 = scmp.eq.s32.totalorder %s22, 1
      %p61 = por %p59, %p60
      %p62 = scmp.ne.s32.totalorder %s53, %s54
      %p63 = scmp.eq.s32.totalorder %s22, 0
      %p64 = por %p62, %p63
      %p65 = scmp.ne.s32.totalorder %s53, %s54
      %p66 = scmp.eq.s32.totalorder %s23, 1
      %p67 = por %p65, %p66
      %p69 = scmp.ne.s32.totalorder %s54, %s68
      %p70 = scmp.eq.s32.totalorder %s23, 0
      %p71 = por %p69, %p70
      %s73 = sadd.s32 %s72, 1
      %p76 = scmp.eq.s32.totalorder %s17, 1
      %p77 = scmp.ne.s32.totalorder %s72, %s74
      %p78 = scmp.eq.s32.totalorder %s17, 0
      %p79 = por %p77, %p78
      %p80 = scmp.ne.s32.totalorder %s72, %s74
      %p81 = scmp.eq.s32.totalorder %s22, 1
      %p82 = por %p80, %p81
      %p83 = scmp.ne.s32.totalorder %s74, %s75
      %p84 = scmp.eq.s32.totalorder %s22, 0
      %p85 = por %p83, %p84
      %p86 = scmp.ne.s32.totalorder %s74, %s75
      %p87 = scmp.eq.s32.totalorder %s23, 1
      %p88 = por %p86, %p87
      %p90 = scmp.ne.s32.totalorder %s75, %s89
      %p91 = scmp.eq.s32.totalorder %s23, 0
      %p92 = por %p90, %p91
      %s94 = sadd.s32 %s93, 1
      %p97 = scmp.eq.s32.totalorder %s17, 1
      %p98 = scmp.ne.s32.totalorder %s93, %s95
      %p99 = scmp.eq.s32.totalorder %s17, 0
      %p100 = por %p98, %p99
      %p101 = scmp.ne.s32.totalorder %s93, %s95
      %p102 = scmp.eq.s32.totalorder %s22, 1
      %p103 = por %p101, %p102
      %p104 = scmp.ne.s32.totalorder %s95, %s96
      %p105 = scmp.eq.s32.totalorder %s22, 0
      %p106 = por %p104, %p105
      %p107 = scmp.ne.s32.totalorder %s95, %s96
      %p108 = scmp.eq.s32.totalorder %s23, 1
      %p109 = por %p107, %p108
      %p111 = scmp.ne.s32.totalorder %s96, %s110
      %p112 = scmp.eq.s32.totalorder %s23, 0
      %p113 = por %p111, %p112
      %s115 = sadd.s32 %s114, 1
      %p118 = scmp.eq.s32.totalorder %s17, 1
      %p119 = scmp.ne.s32.totalorder %s114, %s116
      %p120 = scmp.eq.s32.totalorder %s17, 0
      %p121 = por %p119, %p120
      %p122 = scmp.ne.s32.totalorder %s114, %s116
      %p123 = scmp.eq.s32.totalorder %s22, 1
      %p124 = por %p122, %p123
      %p125 = scmp.ne.s32.totalorder %s116, %s117
      %p126 = scmp.eq.s32.totalorder %s22, 0
      %p127 = por %p125, %p126
      %p128 = scmp.ne.s32.totalorder %s116, %s117
      %p129 = scmp.eq.s32.totalorder %s23, 1
      %p130 = por %p128, %p129
      %p132 = scmp.ne.s32.totalorder %s117, %s131
      %p133 = scmp.eq.s32.totalorder %s23, 0
      %p134 = por %p132, %p133
      %s136 = sadd.s32 %s135, 1
      %p139 = scmp.eq.s32.totalorder %s17, 1
      %p140 = scmp.ne.s32.totalorder %s135, %s137
      %p141 = scmp.eq.s32.totalorder %s17, 0
      %p142 = por %p140, %p141
      %p143 = scmp.ne.s32.totalorder %s135, %s137
      %p144 = scmp.eq.s32.totalorder %s22, 1
      %p145 = por %p143, %p144
      %p146 = scmp.ne.s32.totalorder %s137, %s138
      %p147 = scmp.eq.s32.totalorder %s22, 0
      %p148 = por %p146, %p147
      %p149 = scmp.ne.s32.totalorder %s137, %s138
      %p150 = scmp.eq.s32.totalorder %s23, 1
      %p151 = por %p149, %p150
      %p153 = scmp.ne.s32.totalorder %s138, %s152
      %p154 = scmp.eq.s32.totalorder %s23, 0
      %p155 = por %p153, %p154
      %s157 = sadd.s32 %s156, 1
      %p160 = scmp.eq.s32.totalorder %s17, 1
      %p161 = scmp.ne.s32.totalorder %s156, %s158
      %p162 = scmp.eq.s32.totalorder %s17, 0
      %p163 = por %p161, %p162
      %p164 = scmp.ne.s32.totalorder %s156, %s158
      %p165 = scmp.eq.s32.totalorder %s22, 1
      %p166 = por %p164, %p165
      %p167 = scmp.ne.s32.totalorder %s158, %s159
      %p168 = scmp.eq.s32.totalorder %s22, 0
      %p169 = por %p167, %p168
      %p170 = scmp.ne.s32.totalorder %s158, %s159
      %p171 = scmp.eq.s32.totalorder %s23, 1
      %p172 = por %p170, %p171
      %p174 = scmp.ne.s32.totalorder %s159, %s173
      %p175 = scmp.eq.s32.totalorder %s23, 0
      %p176 = por %p174, %p175
      %s177 = ssub.s32 %s17, %s24
      %p178 = scmp.eq.s32.totalorder %s177, 0
      %s180 = sadd.s32 %s179, 1
      %s181 = scalar_select %p178, %s179, %s180
      %p184 = pneg %p178
      %p185 = scmp.eq.s32.totalorder %s17, 1
      %p186 = por %p184, %p185
      %p187 = scmp.ne.s32.totalorder %s179, %s182
      %p188 = scmp.eq.s32.totalorder %s17, 0
      %p189 = por %p187, %p188
      %p190 = scmp.ne.s32.totalorder %s179, %s182
      %p191 = scmp.eq.s32.totalorder %s22, 1
      %p192 = por %p190, %p191
      %p193 = scmp.ne.s32.totalorder %s182, %s183
      %p194 = scmp.eq.s32.totalorder %s22, 0
      %p195 = por %p193, %p194
      %p196 = scmp.ne.s32.totalorder %s182, %s183
      %p197 = scmp.eq.s32.totalorder %s23, 1
      %p198 = por %p196, %p197
      %p200 = scmp.ne.s32.totalorder %s183, %s199
      %p201 = scmp.eq.s32.totalorder %s23, 0
      %p202 = por %p200, %p201
      %p203 = scmp.le.s32.totalorder 1, %s17
      %p204 = scmp.lt.s32.totalorder %s17, 3
      %p205 = pnand %p203, %p204
      %p206 = pneg %p205
      // Predicated region
      $region9: #{prior_discriminator.1} parent=5 // pred_check
        _
      $region10: #{prior_discriminator.1} parent=5 // pred_check_branch
        %208 = sbr.rel (%p205) target = $region12
      $region11: #{prior_discriminator.1} parent=5 // pred_region
        %s209 = ssub.s32 %s17, 1
        // Predicated region
        $region13: #{prior_discriminator.1} parent=11 // pred_check
          %p210 = pneg %p64
        $region14: #{prior_discriminator.1} parent=11 // pred_check_branch
          %212 = sbr.rel (%p210) target = $region16
        $region15: #{prior_discriminator.1} parent=11 // pred_region
          _
        $region16: #{prior_discriminator.1} parent=11 // pred_fallthru
          _
        // Predicated region
        $region17: #{prior_discriminator.1} parent=11 // pred_check
          %p213 = pneg %p85
        $region18: #{prior_discriminator.1} parent=11 // pred_check_branch
          %215 = sbr.rel (%p213) target = $region20
        $region19: #{prior_discriminator.1} parent=11 // pred_region
          _
        $region20: #{prior_discriminator.1} parent=11 // pred_fallthru
          _
        // Predicated region
        $region21: #{prior_discriminator.1} parent=11 // pred_check
          %p216 = pneg %p106
        $region22: #{prior_discriminator.1} parent=11 // pred_check_branch
          %218 = sbr.rel (%p216) target = $region24
        $region23: #{prior_discriminator.1} parent=11 // pred_region
          _
        $region24: #{prior_discriminator.1} parent=11 // pred_fallthru
          _
        // Predicated region
        $region25: #{prior_discriminator.1} parent=11 // pred_check
          %p219 = pneg %p127
        $region26: #{prior_discriminator.1} parent=11 // pred_check_branch
          %221 = sbr.rel (%p219) target = $region28
        $region27: #{prior_discriminator.1} parent=11 // pred_region
          _
        $region28: #{prior_discriminator.1} parent=11 // pred_fallthru
          _
        // Predicated region
        $region29: #{prior_discriminator.1} parent=11 // pred_check
          %p222 = pneg %p148
        $region30: #{prior_discriminator.1} parent=11 // pred_check_branch
          %224 = sbr.rel (%p222) target = $region32
        $region31: #{prior_discriminator.1} parent=11 // pred_region
          _
        $region32: #{prior_discriminator.1} parent=11 // pred_fallthru
          _
        // Predicated region
        $region33: #{prior_discriminator.1} parent=11 // pred_check
          %p225 = pneg %p169
        $region34: #{prior_discriminator.1} parent=11 // pred_check_branch
          %227 = sbr.rel (%p225) target = $region36
        $region35: #{prior_discriminator.1} parent=11 // pred_region
          _
        $region36: #{prior_discriminator.1} parent=11 // pred_fallthru
          _
      $region12: #{prior_discriminator.1} parent=5 // pred_fallthru
        _
      %p228 = scmp.lt.s32.totalorder %s17, 2
      // Predicated region
      $region37: #{prior_discriminator.1} parent=5 // pred_check
        %p229 = pneg %p228
      $region38: #{prior_discriminator.1} parent=5 // pred_check_branch
        %231 = sbr.rel (%p229) target = $region40
      $region39: #{prior_discriminator.1} parent=5 // pred_region
        // Predicated region
        $region41: #{prior_discriminator.1} parent=39 // pred_check
          %p232 = pneg %p37
        $region42: #{prior_discriminator.1} parent=39 // pred_check_branch
          %234 = sbr.rel (%p232) target = $region44
        $region43: #{prior_discriminator.1} parent=39 // pred_region
          %s235 = smul.u32 64, %s17
          %p236 = scmp.lt.s32.totalorder %s235, 127
          %s237 = scalar_select %p236, %s235, 127
          %s238 = smul.addr %s237, 8
          %s239 = scalar_lea.vmem %s0, %s238
          %s240 = smul.u32 64, %s17
        $region44: #{prior_discriminator.1} parent=39 // pred_fallthru
          _
      $region40: #{prior_discriminator.1} parent=5 // pred_fallthru
        _
      %p241 = scmp.le.s32.totalorder 1, %s17
      %p242 = scmp.lt.s32.totalorder %s17, 3
      %p243 = pnand %p241, %p242
      %p244 = pneg %p243
      // Predicated region
      $region45: #{prior_discriminator.1} parent=5 // pred_check
        _
      $region46: #{prior_discriminator.1} parent=5 // pred_check_branch
        %246 = sbr.rel (%p243) target = $region48
      $region47: #{prior_discriminator.1} parent=5 // pred_region
        %s247 = ssub.s32 %s17, 1
        %s248 = smul.u32 64, %s22
        %p249 = scmp.lt.s32.totalorder %s248, 127
        %s250 = scalar_select %p249, %s248, 127
        %s251 = smul.addr %s250, 8
        %s252 = scalar_lea.vmem %s0, %s251
        %p253 = pneg %p43
        %p254 = pneg %p40
        %p255 = pneg %p64
        %p256 = pneg %p61
        %p257 = pneg %p85
        %p258 = pneg %p82
        %p259 = pneg %p106
        %p260 = pneg %p103
        %p261 = pneg %p127
        %p262 = pneg %p124
        %p263 = pneg %p148
        %p264 = pneg %p145
        %p265 = pneg %p169
        %p266 = pneg %p166
        %p267 = pneg %p195
        %p268 = pneg %p192
        %s269 = sand.u32 %s182, 1
        %s270 = scalar_lea.sflag [#allocation4], %s269
        %s271 = sand.u32 %s182, 1
        %s272 = smul.addr %s271, 4
        %s273 = scalar_lea.vmem [#allocation3], %s272
        %s274 = smul.u32 64, %s22
        %p275 = scmp.lt.s32.totalorder %s274, 127
        %s276 = scalar_select %p275, %s274, 127
        %s277 = smul.addr %s276, 8
        %s278 = scalar_lea.vmem %s0, %s277
        %s279 = smul.u32 64, %s22
        %v280 = vld [vmem:[%s278] sm:$0xff]
        %v281 = vld [vmem:[%s278 + $0x8] sm:$0xff]
        %v282 = vld [vmem:[%s278 + $0x10] sm:$0xff]
        %v283 = vld [vmem:[%s278 + $0x18] sm:$0xff]
        %v284 = vld [vmem:[%s278 + $0x20] sm:$0xff]
        %v285 = vld [vmem:[%s278 + $0x28] sm:$0xff]
        %v286 = vld [vmem:[%s278 + $0x30] sm:$0xff]
        %v287 = vld [vmem:[%s278 + $0x38] sm:$0xff]
        %v288 = vld [vmem:[%s278 + $0x40] sm:$0xff]
        %v289 = vld [vmem:[%s278 + $0x48] sm:$0xff]
        %v290 = vld [vmem:[%s278 + $0x50] sm:$0xff]
        %v291 = vld [vmem:[%s278 + $0x58] sm:$0xff]
        %v292 = vld [vmem:[%s278 + $0x60] sm:$0xff]
        %v293 = vld [vmem:[%s278 + $0x68] sm:$0xff]
        %v294 = vld [vmem:[%s278 + $0x70] sm:$0xff]
        %v295 = vld [vmem:[%s278 + $0x78] sm:$0xff]
        %v296 = vld [vmem:[%s278 + $0x80] sm:$0xff]
        %v297 = vld [vmem:[%s278 + $0x88] sm:$0xff]
        %v298 = vld [vmem:[%s278 + $0x90] sm:$0xff]
        %v299 = vld [vmem:[%s278 + $0x98] sm:$0xff]
        %v300 = vld [vmem:[%s278 + $0xa0] sm:$0xff]
        %v301 = vld [vmem:[%s278 + $0xa8] sm:$0xff]
        %v302 = vld [vmem:[%s278 + $0xb0] sm:$0xff]
        %v303 = vld [vmem:[%s278 + $0xb8] sm:$0xff]
        %v304 = vld [vmem:[%s278 + $0xc0] sm:$0xff]
        %v305 = vld [vmem:[%s278 + $0xc8] sm:$0xff]
        %v306 = vld [vmem:[%s278 + $0xd0] sm:$0xff]
        %v307 = vld [vmem:[%s278 + $0xd8] sm:$0xff]
        %v308 = vld [vmem:[%s278 + $0xe0] sm:$0xff]
        %v309 = vld [vmem:[%s278 + $0xe8] sm:$0xff]
        %v310 = vld [vmem:[%s278 + $0xf0] sm:$0xff]
        %v311 = vld [vmem:[%s278 + $0xf8] sm:$0xff]
        %v312 = vld [vmem:[%s278 + $0x100] sm:$0xff]
        %v313 = vld [vmem:[%s278 + $0x108] sm:$0xff]
        %v314 = vld [vmem:[%s278 + $0x110] sm:$0xff]
        %v315 = vld [vmem:[%s278 + $0x118] sm:$0xff]
        %v316 = vld [vmem:[%s278 + $0x120] sm:$0xff]
        %v317 = vld [vmem:[%s278 + $0x128] sm:$0xff]
        %v318 = vld [vmem:[%s278 + $0x130] sm:$0xff]
        %v319 = vld [vmem:[%s278 + $0x138] sm:$0xff]
        %v320 = vld [vmem:[%s278 + $0x140] sm:$0xff]
        %v321 = vld [vmem:[%s278 + $0x148] sm:$0xff]
        %v322 = vld [vmem:[%s278 + $0x150] sm:$0xff]
        %v323 = vld [vmem:[%s278 + $0x158] sm:$0xff]
        %v324 = vld [vmem:[%s278 + $0x160] sm:$0xff]
        %v325 = vld [vmem:[%s278 + $0x168] sm:$0xff]
        %v326 = vld [vmem:[%s278 + $0x170] sm:$0xff]
        %v327 = vld [vmem:[%s278 + $0x178] sm:$0xff]
        %v328 = vld [vmem:[%s278 + $0x180] sm:$0xff]
        %v329 = vld [vmem:[%s278 + $0x188] sm:$0xff]
        %v330 = vld [vmem:[%s278 + $0x190] sm:$0xff]
        %v331 = vld [vmem:[%s278 + $0x198] sm:$0xff]
        %v332 = vld [vmem:[%s278 + $0x1a0] sm:$0xff]
        %v333 = vld [vmem:[%s278 + $0x1a8] sm:$0xff]
        %v334 = vld [vmem:[%s278 + $0x1b0] sm:$0xff]
        %v335 = vld [vmem:[%s278 + $0x1b8] sm:$0xff]
        %v336 = vld [vmem:[%s278 + $0x1c0] sm:$0xff]
        %v337 = vld [vmem:[%s278 + $0x1c8] sm:$0xff]
        %v338 = vld [vmem:[%s278 + $0x1d0] sm:$0xff]
        %v339 = vld [vmem:[%s278 + $0x1d8] sm:$0xff]
        %v340 = vld [vmem:[%s278 + $0x1e0] sm:$0xff]
        %v341 = vld [vmem:[%s278 + $0x1e8] sm:$0xff]
        %v342 = vld [vmem:[%s278 + $0x1f0] sm:$0xff]
        %v343 = vld [vmem:[%s278 + $0x1f8] sm:$0xff]
        %v344 = vld [vmem:[%s1] sm:$0xff]
        %v345 = vld [vmem:[%s1 + $0x8] sm:$0xff]
        %v346 = vld [vmem:[%s1 + $0x10] sm:$0xff]
        %v347 = vld [vmem:[%s1 + $0x18] sm:$0xff]
        %v348 = vld [vmem:[%s1 + $0x20] sm:$0xff]
        %v349 = vld [vmem:[%s1 + $0x28] sm:$0xff]
        %v350 = vld [vmem:[%s1 + $0x30] sm:$0xff]
        %v351 = vld [vmem:[%s1 + $0x38] sm:$0xff]
        %v352 = vld [vmem:[%s1 + $0x40] sm:$0xff]
        %v353 = vld [vmem:[%s1 + $0x48] sm:$0xff]
        %v354 = vld [vmem:[%s1 + $0x50] sm:$0xff]
        %v355 = vld [vmem:[%s1 + $0x58] sm:$0xff]
        %v356 = vld [vmem:[%s1 + $0x60] sm:$0xff]
        %v357 = vld [vmem:[%s1 + $0x68] sm:$0xff]
        %v358 = vld [vmem:[%s1 + $0x70] sm:$0xff]
        %v359 = vld [vmem:[%s1 + $0x78] sm:$0xff]
        %v360 = vld [vmem:[%s2] sm:$0x1]
        %v362 = vlaneseq
        %v363 = vshrl.u32 %v362, 7
        %v364 = vsub.s32 0, %v363
        %v365 = vrot.slane %v360, %v364
        %367 = vmatprep.subr.mxu0 0.0
        %368 = vmatpush1.msra.mxu0 %v344
        %369 = vmatprep.subr.mxu0 0.0
        %370 = vmatpush1.msra.mxu0 %v345
        %371 = vmatprep.subr.mxu0 0.0
        %372 = vmatpush1.msra.mxu0 %v346
        %373 = vmatprep.subr.mxu0 0.0
        %374 = vmatpush1.msra.mxu0 %v347
        %375 = vmatprep.subr.mxu0 0.0
        %376 = vmatpush1.msra.mxu0 %v348
        %377 = vmatprep.subr.mxu0 0.0
        %378 = vmatpush1.msra.mxu0 %v349
        %379 = vmatprep.subr.mxu0 0.0
        %380 = vmatpush1.msra.mxu0 %v350
        %381 = vmatprep.subr.mxu0 0.0
        %382 = vmatpush1.msra.mxu0 %v351
        %383 = vmatprep.subr.mxu0 0.0
        %384 = vmatpush1.msra.mxu0 %v352
        %385 = vmatprep.subr.mxu0 0.0
        %386 = vmatpush1.msra.mxu0 %v353
        %387 = vmatprep.subr.mxu0 0.0
        %388 = vmatpush1.msra.mxu0 %v354
        %389 = vmatprep.subr.mxu0 0.0
        %390 = vmatpush1.msra.mxu0 %v355
        %391 = vmatprep.subr.mxu0 0.0
        %392 = vmatpush1.msra.mxu0 %v356
        %393 = vmatprep.subr.mxu0 0.0
        %394 = vmatpush1.msra.mxu0 %v357
        %395 = vmatprep.subr.mxu0 0.0
        %396 = vmatpush1.msra.mxu0 %v358
        %397 = vmatprep.subr.mxu0 0.0
        %398 = vmatpush1.msra.mxu0 %v359
        %399 = vmatprep.subr.mxu0 0.0
        %400 = vmatpush1.msra.mxu0 0.0
        %401 = vmatprep.subr.mxu0 0.0
        %402 = vmatpush1.msra.mxu0 0.0
        %403 = vmatprep.subr.mxu0 0.0
        %404 = vmatpush1.msra.mxu0 0.0
        %405 = vmatprep.subr.mxu0 0.0
        %406 = vmatpush1.msra.mxu0 0.0
        %407 = vmatprep.subr.mxu0 0.0
        %408 = vmatpush1.msra.mxu0 0.0
        %409 = vmatprep.subr.mxu0 0.0
        %410 = vmatpush1.msra.mxu0 0.0
        %411 = vmatprep.subr.mxu0 0.0
        %412 = vmatpush1.msra.mxu0 0.0
        %413 = vmatprep.subr.mxu0 0.0
        %414 = vmatpush1.msra.mxu0 0.0
        %415 = vmatprep.subr.mxu0 0.0
        %416 = vmatpush1.msra.mxu0 0.0
        %417 = vmatprep.subr.mxu0 0.0
        %418 = vmatpush1.msra.mxu0 0.0
        %419 = vmatprep.subr.mxu0 0.0
        %420 = vmatpush1.msra.mxu0 0.0
        %421 = vmatprep.subr.mxu0 0.0
        %422 = vmatpush1.msra.mxu0 0.0
        %423 = vmatprep.subr.mxu0 0.0
        %424 = vmatpush1.msra.mxu0 0.0
        %425 = vmatprep.subr.mxu0 0.0
        %426 = vmatpush1.msra.mxu0 0.0
        %427 = vmatprep.subr.mxu0 0.0
        %428 = vmatpush1.msra.mxu0 0.0
        %429 = vmatprep.subr.mxu0 0.0
        %430 = vmatpush1.msra.mxu0 0.0
        %431 = vmatprep.mubr.f32.mxu0 0.0
        %432 = vmatmul.mubr.f32.gmra.mrb[0].mxu0 %v280
        %v433 = vpop.f32.mrb[0].mxu0
        %v434 = vadd.f32 %v365, %v433
        %v435 = vpop.f32.mrb[0].mxu0
        %436 = vmatprep.mubr.f32.mxu0 0.0
        %437 = vmatmul.mubr.f32.gmra.mrb[0].mxu0 %v281
        %v438 = vpop.f32.mrb[0].mxu0
        %v439 = vadd.f32 %v365, %v438
        %v440 = vpop.f32.mrb[0].mxu0
        %441 = vmatprep.mubr.f32.mxu0 0.0
        %442 = vmatmul.mubr.f32.gmra.mrb[0].mxu0 %v282
        %v443 = vpop.f32.mrb[0].mxu0
        %v444 = vadd.f32 %v365, %v443
        %v445 = vpop.f32.mrb[0].mxu0
        %446 = vmatprep.mubr.f32.mxu0 0.0
        %447 = vmatmul.mubr.f32.gmra.mrb[0].mxu0 %v283
        %v448 = vpop.f32.mrb[0].mxu0
        %v449 = vadd.f32 %v365, %v448
        %v450 = vpop.f32.mrb[0].mxu0
        %451 = vmatprep.mubr.f32.mxu0 0.0
        %452 = vmatmul.mubr.f32.gmra.mrb[0].mxu0 %v284
        %v453 = vpop.f32.mrb[0].mxu0
        %v454 = vadd.f32 %v365, %v453
        %v455 = vpop.f32.mrb[0].mxu0
        %456 = vmatprep.mubr.f32.mxu0 0.0
        %457 = vmatmul.mubr.f32.gmra.mrb[0].mxu0 %v285
        %v458 = vpop.f32.mrb[0].mxu0
        %v459 = vadd.f32 %v365, %v458
        %v460 = vpop.f32.mrb[0].mxu0
        %461 = vmatprep.mubr.f32.mxu0 0.0
        %462 = vmatmul.mubr.f32.gmra.mrb[0].mxu0 %v286
        %v463 = vpop.f32.mrb[0].mxu0
        %v464 = vadd.f32 %v365, %v463
        %v465 = vpop.f32.mrb[0].mxu0
        %466 = vmatprep.mubr.f32.mxu0 0.0
        %467 = vmatmul.mubr.f32.gmra.mrb[0].mxu0 %v287
        %v468 = vpop.f32.mrb[0].mxu0
        %v469 = vadd.f32 %v365, %v468
        %v470 = vpop.f32.mrb[0].mxu0
        %471 = vmatprep.mubr.f32.mxu0 0.0
        %472 = vmatmul.mubr.f32.gmra.mrb[0].mxu0 %v288
        %v473 = vpop.f32.mrb[0].mxu0
        %v474 = vadd.f32 %v365, %v473
        %v475 = vpop.f32.mrb[0].mxu0
        %476 = vmatprep.mubr.f32.mxu0 0.0
        %477 = vmatmul.mubr.f32.gmra.mrb[0].mxu0 %v289
        %v478 = vpop.f32.mrb[0].mxu0
        %v479 = vadd.f32 %v365, %v478
        %v480 = vpop.f32.mrb[0].mxu0
        %481 = vmatprep.mubr.f32.mxu0 0.0
        %482 = vmatmul.mubr.f32.gmra.mrb[0].mxu0 %v290
        %v483 = vpop.f32.mrb[0].mxu0
        %v484 = vadd.f32 %v365, %v483
        %v485 = vpop.f32.mrb[0].mxu0
        %486 = vmatprep.mubr.f32.mxu0 0.0
        %487 = vmatmul.mubr.f32.gmra.mrb[0].mxu0 %v291
        %v488 = vpop.f32.mrb[0].mxu0
        %v489 = vadd.f32 %v365, %v488
        %v490 = vpop.f32.mrb[0].mxu0
        %491 = vmatprep.mubr.f32.mxu0 0.0
        %492 = vmatmul.mubr.f32.gmra.mrb[0].mxu0 %v292
        %v493 = vpop.f32.mrb[0].mxu0
        %v494 = vadd.f32 %v365, %v493
        %v495 = vpop.f32.mrb[0].mxu0
        %496 = vmatprep.mubr.f32.mxu0 0.0
        %497 = vmatmul.mubr.f32.gmra.mrb[0].mxu0 %v293
        %v498 = vpop.f32.mrb[0].mxu0
        %v499 = vadd.f32 %v365, %v498
        %v500 = vpop.f32.mrb[0].mxu0
        %501 = vmatprep.mubr.f32.mxu0 0.0
        %502 = vmatmul.mubr.f32.gmra.mrb[0].mxu0 %v294
        %v503 = vpop.f32.mrb[0].mxu0
        %v504 = vadd.f32 %v365, %v503
        %v505 = vpop.f32.mrb[0].mxu0
        %506 = vmatprep.mubr.f32.mxu0 0.0
        %507 = vmatmul.mubr.f32.gmra.mrb[0].mxu0 %v295
        %v508 = vpop.f32.mrb[0].mxu0
        %v509 = vadd.f32 %v365, %v508
        %v510 = vpop.f32.mrb[0].mxu0
        %511 = vmatprep.mubr.f32.mxu0 0.0
        %512 = vmatmul.mubr.f32.gmra.mrb[0].mxu0 %v296
        %v513 = vpop.f32.mrb[0].mxu0
        %v514 = vadd.f32 %v365, %v513
        %v515 = vpop.f32.mrb[0].mxu0
        %516 = vmatprep.mubr.f32.mxu0 0.0
        %517 = vmatmul.mubr.f32.gmra.mrb[0].mxu0 %v297
        %v518 = vpop.f32.mrb[0].mxu0
        %v519 = vadd.f32 %v365, %v518
        %v520 = vpop.f32.mrb[0].mxu0
        %521 = vmatprep.mubr.f32.mxu0 0.0
        %522 = vmatmul.mubr.f32.gmra.mrb[0].mxu0 %v298
        %v523 = vpop.f32.mrb[0].mxu0
        %v524 = vadd.f32 %v365, %v523
        %v525 = vpop.f32.mrb[0].mxu0
        %526 = vmatprep.mubr.f32.mxu0 0.0
        %527 = vmatmul.mubr.f32.gmra.mrb[0].mxu0 %v299
        %v528 = vpop.f32.mrb[0].mxu0
        %v529 = vadd.f32 %v365, %v528
        %v530 = vpop.f32.mrb[0].mxu0
        %531 = vmatprep.mubr.f32.mxu0 0.0
        %532 = vmatmul.mubr.f32.gmra.mrb[0].mxu0 %v300
        %v533 = vpop.f32.mrb[0].mxu0
        %v534 = vadd.f32 %v365, %v533
        %v535 = vpop.f32.mrb[0].mxu0
        %536 = vmatprep.mubr.f32.mxu0 0.0
        %537 = vmatmul.mubr.f32.gmra.mrb[0].mxu0 %v301
        %v538 = vpop.f32.mrb[0].mxu0
        %v539 = vadd.f32 %v365, %v538
        %v540 = vpop.f32.mrb[0].mxu0
        %541 = vmatprep.mubr.f32.mxu0 0.0
        %542 = vmatmul.mubr.f32.gmra.mrb[0].mxu0 %v302
        %v543 = vpop.f32.mrb[0].mxu0
        %v544 = vadd.f32 %v365, %v543
        %v545 = vpop.f32.mrb[0].mxu0
        %546 = vmatprep.mubr.f32.mxu0 0.0
        %547 = vmatmul.mubr.f32.gmra.mrb[0].mxu0 %v303
        %v548 = vpop.f32.mrb[0].mxu0
        %v549 = vadd.f32 %v365, %v548
        %v550 = vpop.f32.mrb[0].mxu0
        %551 = vmatprep.mubr.f32.mxu0 0.0
        %552 = vmatmul.mubr.f32.gmra.mrb[0].mxu0 %v304
        %v553 = vpop.f32.mrb[0].mxu0
        %v554 = vadd.f32 %v365, %v553
        %v555 = vpop.f32.mrb[0].mxu0
        %556 = vmatprep.mubr.f32.mxu0 0.0
        %557 = vmatmul.mubr.f32.gmra.mrb[0].mxu0 %v305
        %v558 = vpop.f32.mrb[0].mxu0
        %v559 = vadd.f32 %v365, %v558
        %v560 = vpop.f32.mrb[0].mxu0
        %561 = vmatprep.mubr.f32.mxu0 0.0
        %562 = vmatmul.mubr.f32.gmra.mrb[0].mxu0 %v306
        %v563 = vpop.f32.mrb[0].mxu0
        %v564 = vadd.f32 %v365, %v563
        %v565 = vpop.f32.mrb[0].mxu0
        %566 = vmatprep.mubr.f32.mxu0 0.0
        %567 = vmatmul.mubr.f32.gmra.mrb[0].mxu0 %v307
        %v568 = vpop.f32.mrb[0].mxu0
        %v569 = vadd.f32 %v365, %v568
        %v570 = vpop.f32.mrb[0].mxu0
        %571 = vmatprep.mubr.f32.mxu0 0.0
        %572 = vmatmul.mubr.f32.gmra.mrb[0].mxu0 %v308
        %v573 = vpop.f32.mrb[0].mxu0
        %v574 = vadd.f32 %v365, %v573
        %v575 = vpop.f32.mrb[0].mxu0
        %576 = vmatprep.mubr.f32.mxu0 0.0
        %577 = vmatmul.mubr.f32.gmra.mrb[0].mxu0 %v309
        %v578 = vpop.f32.mrb[0].mxu0
        %v579 = vadd.f32 %v365, %v578
        %v580 = vpop.f32.mrb[0].mxu0
        %581 = vmatprep.mubr.f32.mxu0 0.0
        %582 = vmatmul.mubr.f32.gmra.mrb[0].mxu0 %v310
        %v583 = vpop.f32.mrb[0].mxu0
        %v584 = vadd.f32 %v365, %v583
        %v585 = vpop.f32.mrb[0].mxu0
        %586 = vmatprep.mubr.f32.mxu0 0.0
        %587 = vmatmul.mubr.f32.gmra.mrb[0].mxu0 %v311
        %v588 = vpop.f32.mrb[0].mxu0
        %v589 = vadd.f32 %v365, %v588
        %v590 = vpop.f32.mrb[0].mxu0
        %591 = vmatprep.mubr.f32.mxu0 0.0
        %592 = vmatmul.mubr.f32.gmra.mrb[0].mxu0 %v312
        %v593 = vpop.f32.mrb[0].mxu0
        %v594 = vadd.f32 %v365, %v593
        %v595 = vpop.f32.mrb[0].mxu0
        %596 = vmatprep.mubr.f32.mxu0 0.0
        %597 = vmatmul.mubr.f32.gmra.mrb[0].mxu0 %v313
        %v598 = vpop.f32.mrb[0].mxu0
        %v599 = vadd.f32 %v365, %v598
        %v600 = vpop.f32.mrb[0].mxu0
        %601 = vmatprep.mubr.f32.mxu0 0.0
        %602 = vmatmul.mubr.f32.gmra.mrb[0].mxu0 %v314
        %v603 = vpop.f32.mrb[0].mxu0
        %v604 = vadd.f32 %v365, %v603
        %v605 = vpop.f32.mrb[0].mxu0
        %606 = vmatprep.mubr.f32.mxu0 0.0
        %607 = vmatmul.mubr.f32.gmra.mrb[0].mxu0 %v315
        %v608 = vpop.f32.mrb[0].mxu0
        %v609 = vadd.f32 %v365, %v608
        %v610 = vpop.f32.mrb[0].mxu0
        %611 = vmatprep.mubr.f32.mxu0 0.0
        %612 = vmatmul.mubr.f32.gmra.mrb[0].mxu0 %v316
        %v613 = vpop.f32.mrb[0].mxu0
        %v614 = vadd.f32 %v365, %v613
        %v615 = vpop.f32.mrb[0].mxu0
        %616 = vmatprep.mubr.f32.mxu0 0.0
        %617 = vmatmul.mubr.f32.gmra.mrb[0].mxu0 %v317
        %v618 = vpop.f32.mrb[0].mxu0
        %v619 = vadd.f32 %v365, %v618
        %v620 = vpop.f32.mrb[0].mxu0
        %621 = vmatprep.mubr.f32.mxu0 0.0
        %622 = vmatmul.mubr.f32.gmra.mrb[0].mxu0 %v318
        %v623 = vpop.f32.mrb[0].mxu0
        %v624 = vadd.f32 %v365, %v623
        %v625 = vpop.f32.mrb[0].mxu0
        %626 = vmatprep.mubr.f32.mxu0 0.0
        %627 = vmatmul.mubr.f32.gmra.mrb[0].mxu0 %v319
        %v628 = vpop.f32.mrb[0].mxu0
        %v629 = vadd.f32 %v365, %v628
        %v630 = vpop.f32.mrb[0].mxu0
        %631 = vmatprep.mubr.f32.mxu0 0.0
        %632 = vmatmul.mubr.f32.gmra.mrb[0].mxu0 %v320
        %v633 = vpop.f32.mrb[0].mxu0
        %v634 = vadd.f32 %v365, %v633
        %v635 = vpop.f32.mrb[0].mxu0
        %636 = vmatprep.mubr.f32.mxu0 0.0
        %637 = vmatmul.mubr.f32.gmra.mrb[0].mxu0 %v321
        %v638 = vpop.f32.mrb[0].mxu0
        %v639 = vadd.f32 %v365, %v638
        %v640 = vpop.f32.mrb[0].mxu0
        %641 = vmatprep.mubr.f32.mxu0 0.0
        %642 = vmatmul.mubr.f32.gmra.mrb[0].mxu0 %v322
        %v643 = vpop.f32.mrb[0].mxu0
        %v644 = vadd.f32 %v365, %v643
        %v645 = vpop.f32.mrb[0].mxu0
        %646 = vmatprep.mubr.f32.mxu0 0.0
        %647 = vmatmul.mubr.f32.gmra.mrb[0].mxu0 %v323
        %v648 = vpop.f32.mrb[0].mxu0
        %v649 = vadd.f32 %v365, %v648
        %v650 = vpop.f32.mrb[0].mxu0
        %651 = vmatprep.mubr.f32.mxu0 0.0
        %652 = vmatmul.mubr.f32.gmra.mrb[0].mxu0 %v324
        %v653 = vpop.f32.mrb[0].mxu0
        %v654 = vadd.f32 %v365, %v653
        %v655 = vpop.f32.mrb[0].mxu0
        %656 = vmatprep.mubr.f32.mxu0 0.0
        %657 = vmatmul.mubr.f32.gmra.mrb[0].mxu0 %v325
        %v658 = vpop.f32.mrb[0].mxu0
        %v659 = vadd.f32 %v365, %v658
        %v660 = vpop.f32.mrb[0].mxu0
        %661 = vmatprep.mubr.f32.mxu0 0.0
        %662 = vmatmul.mubr.f32.gmra.mrb[0].mxu0 %v326
        %v663 = vpop.f32.mrb[0].mxu0
        %v664 = vadd.f32 %v365, %v663
        %v665 = vpop.f32.mrb[0].mxu0
        %666 = vmatprep.mubr.f32.mxu0 0.0
        %667 = vmatmul.mubr.f32.gmra.mrb[0].mxu0 %v327
        %v668 = vpop.f32.mrb[0].mxu0
        %v669 = vadd.f32 %v365, %v668
        %v670 = vpop.f32.mrb[0].mxu0
        %671 = vmatprep.mubr.f32.mxu0 0.0
        %672 = vmatmul.mubr.f32.gmra.mrb[0].mxu0 %v328
        %v673 = vpop.f32.mrb[0].mxu0
        %v674 = vadd.f32 %v365, %v673
        %v675 = vpop.f32.mrb[0].mxu0
        %676 = vmatprep.mubr.f32.mxu0 0.0
        %677 = vmatmul.mubr.f32.gmra.mrb[0].mxu0 %v329
        %v678 = vpop.f32.mrb[0].mxu0
        %v679 = vadd.f32 %v365, %v678
        %v680 = vpop.f32.mrb[0].mxu0
        %681 = vmatprep.mubr.f32.mxu0 0.0
        %682 = vmatmul.mubr.f32.gmra.mrb[0].mxu0 %v330
        %v683 = vpop.f32.mrb[0].mxu0
        %v684 = vadd.f32 %v365, %v683
        %v685 = vpop.f32.mrb[0].mxu0
        %686 = vmatprep.mubr.f32.mxu0 0.0
        %687 = vmatmul.mubr.f32.gmra.mrb[0].mxu0 %v331
        %v688 = vpop.f32.mrb[0].mxu0
        %v689 = vadd.f32 %v365, %v688
        %v690 = vpop.f32.mrb[0].mxu0
        %691 = vmatprep.mubr.f32.mxu0 0.0
        %692 = vmatmul.mubr.f32.gmra.mrb[0].mxu0 %v332
        %v693 = vpop.f32.mrb[0].mxu0
        %v694 = vadd.f32 %v365, %v693
        %v695 = vpop.f32.mrb[0].mxu0
        %696 = vmatprep.mubr.f32.mxu0 0.0
        %697 = vmatmul.mubr.f32.gmra.mrb[0].mxu0 %v333
        %v698 = vpop.f32.mrb[0].mxu0
        %v699 = vadd.f32 %v365, %v698
        %v700 = vpop.f32.mrb[0].mxu0
        %701 = vmatprep.mubr.f32.mxu0 0.0
        %702 = vmatmul.mubr.f32.gmra.mrb[0].mxu0 %v334
        %v703 = vpop.f32.mrb[0].mxu0
        %v704 = vadd.f32 %v365, %v703
        %v705 = vpop.f32.mrb[0].mxu0
        %706 = vmatprep.mubr.f32.mxu0 0.0
        %707 = vmatmul.mubr.f32.gmra.mrb[0].mxu0 %v335
        %v708 = vpop.f32.mrb[0].mxu0
        %v709 = vadd.f32 %v365, %v708
        %v710 = vpop.f32.mrb[0].mxu0
        %711 = vmatprep.mubr.f32.mxu0 0.0
        %712 = vmatmul.mubr.f32.gmra.mrb[0].mxu0 %v336
        %v713 = vpop.f32.mrb[0].mxu0
        %v714 = vadd.f32 %v365, %v713
        %v715 = vpop.f32.mrb[0].mxu0
        %716 = vmatprep.mubr.f32.mxu0 0.0
        %717 = vmatmul.mubr.f32.gmra.mrb[0].mxu0 %v337
        %v718 = vpop.f32.mrb[0].mxu0
        %v719 = vadd.f32 %v365, %v718
        %v720 = vpop.f32.mrb[0].mxu0
        %721 = vmatprep.mubr.f32.mxu0 0.0
        %722 = vmatmul.mubr.f32.gmra.mrb[0].mxu0 %v338
        %v723 = vpop.f32.mrb[0].mxu0
        %v724 = vadd.f32 %v365, %v723
        %v725 = vpop.f32.mrb[0].mxu0
        %726 = vmatprep.mubr.f32.mxu0 0.0
        %727 = vmatmul.mubr.f32.gmra.mrb[0].mxu0 %v339
        %v728 = vpop.f32.mrb[0].mxu0
        %v729 = vadd.f32 %v365, %v728
        %v730 = vpop.f32.mrb[0].mxu0
        %731 = vmatprep.mubr.f32.mxu0 0.0
        %732 = vmatmul.mubr.f32.gmra.mrb[0].mxu0 %v340
        %v733 = vpop.f32.mrb[0].mxu0
        %v734 = vadd.f32 %v365, %v733
        %v735 = vpop.f32.mrb[0].mxu0
        %736 = vmatprep.mubr.f32.mxu0 0.0
        %737 = vmatmul.mubr.f32.gmra.mrb[0].mxu0 %v341
        %v738 = vpop.f32.mrb[0].mxu0
        %v739 = vadd.f32 %v365, %v738
        %v740 = vpop.f32.mrb[0].mxu0
        %741 = vmatprep.mubr.f32.mxu0 0.0
        %742 = vmatmul.mubr.f32.gmra.mrb[0].mxu0 %v342
        %v743 = vpop.f32.mrb[0].mxu0
        %v744 = vadd.f32 %v365, %v743
        %v745 = vpop.f32.mrb[0].mxu0
        %746 = vmatprep.mubr.f32.mxu0 0.0
        %747 = vmatmul.mubr.f32.gmra.mrb[0].mxu0 %v343
        %v748 = vpop.f32.mrb[0].mxu0
        %v749 = vadd.f32 %v365, %v748
        %v750 = vpop.f32.mrb[0].mxu0
        %751 = vdwg.mxu0
        %v752 = vmax.f32 %v434, 0.0
        %v753 = vmax.f32 %v439, 0.0
        %v754 = vmax.f32 %v444, 0.0
        %v755 = vmax.f32 %v449, 0.0
        %v756 = vmax.f32 %v454, 0.0
        %v757 = vmax.f32 %v459, 0.0
        %v758 = vmax.f32 %v464, 0.0
        %v759 = vmax.f32 %v469, 0.0
        %v760 = vmax.f32 %v474, 0.0
        %v761 = vmax.f32 %v479, 0.0
        %v762 = vmax.f32 %v484, 0.0
        %v763 = vmax.f32 %v489, 0.0
        %v764 = vmax.f32 %v494, 0.0
        %v765 = vmax.f32 %v499, 0.0
        %v766 = vmax.f32 %v504, 0.0
        %v767 = vmax.f32 %v509, 0.0
        %v768 = vmax.f32 %v514, 0.0
        %v769 = vmax.f32 %v519, 0.0
        %v770 = vmax.f32 %v524, 0.0
        %v771 = vmax.f32 %v529, 0.0
        %v772 = vmax.f32 %v534, 0.0
        %v773 = vmax.f32 %v539, 0.0
        %v774 = vmax.f32 %v544, 0.0
        %v775 = vmax.f32 %v549, 0.0
        %v776 = vmax.f32 %v554, 0.0
        %v777 = vmax.f32 %v559, 0.0
        %v778 = vmax.f32 %v564, 0.0
        %v779 = vmax.f32 %v569, 0.0
        %v780 = vmax.f32 %v574, 0.0
        %v781 = vmax.f32 %v579, 0.0
        %v782 = vmax.f32 %v584, 0.0
        %v783 = vmax.f32 %v589, 0.0
        %v784 = vmax.f32 %v594, 0.0
        %v785 = vmax.f32 %v599, 0.0
        %v786 = vmax.f32 %v604, 0.0
        %v787 = vmax.f32 %v609, 0.0
        %v788 = vmax.f32 %v614, 0.0
        %v789 = vmax.f32 %v619, 0.0
        %v790 = vmax.f32 %v624, 0.0
        %v791 = vmax.f32 %v629, 0.0
        %v792 = vmax.f32 %v634, 0.0
        %v793 = vmax.f32 %v639, 0.0
        %v794 = vmax.f32 %v644, 0.0
        %v795 = vmax.f32 %v649, 0.0
        %v796 = vmax.f32 %v654, 0.0
        %v797 = vmax.f32 %v659, 0.0
        %v798 = vmax.f32 %v664, 0.0
        %v799 = vmax.f32 %v669, 0.0
        %v800 = vmax.f32 %v674, 0.0
        %v801 = vmax.f32 %v679, 0.0
        %v802 = vmax.f32 %v684, 0.0
        %v803 = vmax.f32 %v689, 0.0
        %v804 = vmax.f32 %v694, 0.0
        %v805 = vmax.f32 %v699, 0.0
        %v806 = vmax.f32 %v704, 0.0
        %v807 = vmax.f32 %v709, 0.0
        %v808 = vmax.f32 %v714, 0.0
        %v809 = vmax.f32 %v719, 0.0
        %v810 = vmax.f32 %v724, 0.0
        %v811 = vmax.f32 %v729, 0.0
        %v812 = vmax.f32 %v734, 0.0
        %v813 = vmax.f32 %v739, 0.0
        %v814 = vmax.f32 %v744, 0.0
        %v815 = vmax.f32 %v749, 0.0
        %v816 = vld [vmem:[%s3] sm:$0xff]
        %v817 = vld [vmem:[%s3 + $0x8] sm:$0xff]
        %v818 = vld [vmem:[%s3 + $0x10] sm:$0xff]
        %v819 = vld [vmem:[%s3 + $0x18] sm:$0xff]
        %v820 = vld [vmem:[%s3 + $0x20] sm:$0xff]
        %v821 = vld [vmem:[%s3 + $0x28] sm:$0xff]
        %v822 = vld [vmem:[%s3 + $0x30] sm:$0xff]
        %v823 = vld [vmem:[%s3 + $0x38] sm:$0xff]
        %v824 = vld [vmem:[%s3 + $0x40] sm:$0xff]
        %v825 = vld [vmem:[%s3 + $0x48] sm:$0xff]
        %v826 = vld [vmem:[%s3 + $0x50] sm:$0xff]
        %v827 = vld [vmem:[%s3 + $0x58] sm:$0xff]
        %v828 = vld [vmem:[%s3 + $0x60] sm:$0xff]
        %v829 = vld [vmem:[%s3 + $0x68] sm:$0xff]
        %v830 = vld [vmem:[%s3 + $0x70] sm:$0xff]
        %v831 = vld [vmem:[%s3 + $0x78] sm:$0xff]
        %v832 = vld [vmem:[%s4] sm:$0x1]
        %v834 = vlaneseq
        %v835 = vshrl.u32 %v834, 7
        %v836 = vsub.s32 0, %v835
        %v837 = vrot.slane %v832, %v836
        %839 = vmatprep.subr.mxu0 0.0
        %840 = vmatpush1.msra.mxu0 %v816
        %841 = vmatprep.subr.mxu0 0.0
        %842 = vmatpush1.msra.mxu0 %v817
        %843 = vmatprep.subr.mxu0 0.0
        %844 = vmatpush1.msra.mxu0 %v818
        %845 = vmatprep.subr.mxu0 0.0
        %846 = vmatpush1.msra.mxu0 %v819
        %847 = vmatprep.subr.mxu0 0.0
        %848 = vmatpush1.msra.mxu0 %v820
        %849 = vmatprep.subr.mxu0 0.0
        %850 = vmatpush1.msra.mxu0 %v821
        %851 = vmatprep.subr.mxu0 0.0
        %852 = vmatpush1.msra.mxu0 %v822
        %853 = vmatprep.subr.mxu0 0.0
        %854 = vmatpush1.msra.mxu0 %v823
        %855 = vmatprep.subr.mxu0 0.0
        %856 = vmatpush1.msra.mxu0 %v824
        %857 = vmatprep.subr.mxu0 0.0
        %858 = vmatpush1.msra.mxu0 %v825
        %859 = vmatprep.subr.mxu0 0.0
        %860 = vmatpush1.msra.mxu0 %v826
        %861 = vmatprep.subr.mxu0 0.0
        %862 = vmatpush1.msra.mxu0 %v827
        %863 = vmatprep.subr.mxu0 0.0
        %864 = vmatpush1.msra.mxu0 %v828
        %865 = vmatprep.subr.mxu0 0.0
        %866 = vmatpush1.msra.mxu0 %v829
        %867 = vmatprep.subr.mxu0 0.0
        %868 = vmatpush1.msra.mxu0 %v830
        %869 = vmatprep.subr.mxu0 0.0
        %870 = vmatpush1.msra.mxu0 %v831
        %871 = vmatprep.subr.mxu0 0.0
        %872 = vmatpush1.msra.mxu0 0.0
        %873 = vmatprep.subr.mxu0 0.0
        %874 = vmatpush1.msra.mxu0 0.0
        %875 = vmatprep.subr.mxu0 0.0
        %876 = vmatpush1.msra.mxu0 0.0
        %877 = vmatprep.subr.mxu0 0.0
        %878 = vmatpush1.msra.mxu0 0.0
        %879 = vmatprep.subr.mxu0 0.0
        %880 = vmatpush1.msra.mxu0 0.0
        %881 = vmatprep.subr.mxu0 0.0
        %882 = vmatpush1.msra.mxu0 0.0
        %883 = vmatprep.subr.mxu0 0.0
        %884 = vmatpush1.msra.mxu0 0.0
        %885 = vmatprep.subr.mxu0 0.0
        %886 = vmatpush1.msra.mxu0 0.0
        %887 = vmatprep.subr.mxu0 0.0
        %888 = vmatpush1.msra.mxu0 0.0
        %889 = vmatprep.subr.mxu0 0.0
        %890 = vmatpush1.msra.mxu0 0.0
        %891 = vmatprep.subr.mxu0 0.0
        %892 = vmatpush1.msra.mxu0 0.0
        %893 = vmatprep.subr.mxu0 0.0
        %894 = vmatpush1.msra.mxu0 0.0
        %895 = vmatprep.subr.mxu0 0.0
        %896 = vmatpush1.msra.mxu0 0.0
        %897 = vmatprep.subr.mxu0 0.0
        %898 = vmatpush1.msra.mxu0 0.0
        %899 = vmatprep.subr.mxu0 0.0
        %900 = vmatpush1.msra.mxu0 0.0
        %901 = vmatprep.subr.mxu0 0.0
        %902 = vmatpush1.msra.mxu0 0.0
        %903 = vmatprep.mubr.f32.mxu0 0.0
        %904 = vmatmul.mubr.f32.gmra.mrb[0].mxu0 %v752
        %v905 = vpop.f32.mrb[0].mxu0
        %v906 = vadd.f32 %v837, %v905
        %v907 = vpop.f32.mrb[0].mxu0
        %908 = vmatprep.mubr.f32.mxu0 0.0
        %909 = vmatmul.mubr.f32.gmra.mrb[0].mxu0 %v753
        %v910 = vpop.f32.mrb[0].mxu0
        %v911 = vadd.f32 %v837, %v910
        %v912 = vpop.f32.mrb[0].mxu0
        %913 = vmatprep.mubr.f32.mxu0 0.0
        %914 = vmatmul.mubr.f32.gmra.mrb[0].mxu0 %v754
        %v915 = vpop.f32.mrb[0].mxu0
        %v916 = vadd.f32 %v837, %v915
        %v917 = vpop.f32.mrb[0].mxu0
        %918 = vmatprep.mubr.f32.mxu0 0.0
        %919 = vmatmul.mubr.f32.gmra.mrb[0].mxu0 %v755
        %v920 = vpop.f32.mrb[0].mxu0
        %v921 = vadd.f32 %v837, %v920
        %v922 = vpop.f32.mrb[0].mxu0
        %923 = vmatprep.mubr.f32.mxu0 0.0
        %924 = vmatmul.mubr.f32.gmra.mrb[0].mxu0 %v756
        %v925 = vpop.f32.mrb[0].mxu0
        %v926 = vadd.f32 %v837, %v925
        %v927 = vpop.f32.mrb[0].mxu0
        %928 = vmatprep.mubr.f32.mxu0 0.0
        %929 = vmatmul.mubr.f32.gmra.mrb[0].mxu0 %v757
        %v930 = vpop.f32.mrb[0].mxu0
        %v931 = vadd.f32 %v837, %v930
        %v932 = vpop.f32.mrb[0].mxu0
        %933 = vmatprep.mubr.f32.mxu0 0.0
        %934 = vmatmul.mubr.f32.gmra.mrb[0].mxu0 %v758
        %v935 = vpop.f32.mrb[0].mxu0
        %v936 = vadd.f32 %v837, %v935
        %v937 = vpop.f32.mrb[0].mxu0
        %938 = vmatprep.mubr.f32.mxu0 0.0
        %939 = vmatmul.mubr.f32.gmra.mrb[0].mxu0 %v759
        %v940 = vpop.f32.mrb[0].mxu0
        %v941 = vadd.f32 %v837, %v940
        %v942 = vpop.f32.mrb[0].mxu0
        %943 = vmatprep.mubr.f32.mxu0 0.0
        %944 = vmatmul.mubr.f32.gmra.mrb[0].mxu0 %v760
        %v945 = vpop.f32.mrb[0].mxu0
        %v946 = vadd.f32 %v837, %v945
        %v947 = vpop.f32.mrb[0].mxu0
        %948 = vmatprep.mubr.f32.mxu0 0.0
        %949 = vmatmul.mubr.f32.gmra.mrb[0].mxu0 %v761
        %v950 = vpop.f32.mrb[0].mxu0
        %v951 = vadd.f32 %v837, %v950
        %v952 = vpop.f32.mrb[0].mxu0
        %953 = vmatprep.mubr.f32.mxu0 0.0
        %954 = vmatmul.mubr.f32.gmra.mrb[0].mxu0 %v762
        %v955 = vpop.f32.mrb[0].mxu0
        %v956 = vadd.f32 %v837, %v955
        %v957 = vpop.f32.mrb[0].mxu0
        %958 = vmatprep.mubr.f32.mxu0 0.0
        %959 = vmatmul.mubr.f32.gmra.mrb[0].mxu0 %v763
        %v960 = vpop.f32.mrb[0].mxu0
        %v961 = vadd.f32 %v837, %v960
        %v962 = vpop.f32.mrb[0].mxu0
        %963 = vmatprep.mubr.f32.mxu0 0.0
        %964 = vmatmul.mubr.f32.gmra.mrb[0].mxu0 %v764
        %v965 = vpop.f32.mrb[0].mxu0
        %v966 = vadd.f32 %v837, %v965
        %v967 = vpop.f32.mrb[0].mxu0
        %968 = vmatprep.mubr.f32.mxu0 0.0
        %969 = vmatmul.mubr.f32.gmra.mrb[0].mxu0 %v765
        %v970 = vpop.f32.mrb[0].mxu0
        %v971 = vadd.f32 %v837, %v970
        %v972 = vpop.f32.mrb[0].mxu0
        %973 = vmatprep.mubr.f32.mxu0 0.0
        %974 = vmatmul.mubr.f32.gmra.mrb[0].mxu0 %v766
        %v975 = vpop.f32.mrb[0].mxu0
        %v976 = vadd.f32 %v837, %v975
        %v977 = vpop.f32.mrb[0].mxu0
        %978 = vmatprep.mubr.f32.mxu0 0.0
        %979 = vmatmul.mubr.f32.gmra.mrb[0].mxu0 %v767
        %v980 = vpop.f32.mrb[0].mxu0
        %v981 = vadd.f32 %v837, %v980
        %v982 = vpop.f32.mrb[0].mxu0
        %983 = vmatprep.mubr.f32.mxu0 0.0
        %984 = vmatmul.mubr.f32.gmra.mrb[0].mxu0 %v768
        %v985 = vpop.f32.mrb[0].mxu0
        %v986 = vadd.f32 %v837, %v985
        %v987 = vpop.f32.mrb[0].mxu0
        %988 = vmatprep.mubr.f32.mxu0 0.0
        %989 = vmatmul.mubr.f32.gmra.mrb[0].mxu0 %v769
        %v990 = vpop.f32.mrb[0].mxu0
        %v991 = vadd.f32 %v837, %v990
        %v992 = vpop.f32.mrb[0].mxu0
        %993 = vmatprep.mubr.f32.mxu0 0.0
        %994 = vmatmul.mubr.f32.gmra.mrb[0].mxu0 %v770
        %v995 = vpop.f32.mrb[0].mxu0
        %v996 = vadd.f32 %v837, %v995
        %v997 = vpop.f32.mrb[0].mxu0
        %998 = vmatprep.mubr.f32.mxu0 0.0
        %999 = vmatmul.mubr.f32.gmra.mrb[0].mxu0 %v771
        %v1000 = vpop.f32.mrb[0].mxu0
        %v1001 = vadd.f32 %v837, %v1000
        %v1002 = vpop.f32.mrb[0].mxu0
        %1003 = vmatprep.mubr.f32.mxu0 0.0
        %1004 = vmatmul.mubr.f32.gmra.mrb[0].mxu0 %v772
        %v1005 = vpop.f32.mrb[0].mxu0
        %v1006 = vadd.f32 %v837, %v1005
        %v1007 = vpop.f32.mrb[0].mxu0
        %1008 = vmatprep.mubr.f32.mxu0 0.0
        %1009 = vmatmul.mubr.f32.gmra.mrb[0].mxu0 %v773
        %v1010 = vpop.f32.mrb[0].mxu0
        %v1011 = vadd.f32 %v837, %v1010
        %v1012 = vpop.f32.mrb[0].mxu0
        %1013 = vmatprep.mubr.f32.mxu0 0.0
        %1014 = vmatmul.mubr.f32.gmra.mrb[0].mxu0 %v774
        %v1015 = vpop.f32.mrb[0].mxu0
        %v1016 = vadd.f32 %v837, %v1015
        %v1017 = vpop.f32.mrb[0].mxu0
        %1018 = vmatprep.mubr.f32.mxu0 0.0
        %1019 = vmatmul.mubr.f32.gmra.mrb[0].mxu0 %v775
        %v1020 = vpop.f32.mrb[0].mxu0
        %v1021 = vadd.f32 %v837, %v1020
        %v1022 = vpop.f32.mrb[0].mxu0
        %1023 = vmatprep.mubr.f32.mxu0 0.0
        %1024 = vmatmul.mubr.f32.gmra.mrb[0].mxu0 %v776
        %v1025 = vpop.f32.mrb[0].mxu0
        %v1026 = vadd.f32 %v837, %v1025
        %v1027 = vpop.f32.mrb[0].mxu0
        %1028 = vmatprep.mubr.f32.mxu0 0.0
        %1029 = vmatmul.mubr.f32.gmra.mrb[0].mxu0 %v777
        %v1030 = vpop.f32.mrb[0].mxu0
        %v1031 = vadd.f32 %v837, %v1030
        %v1032 = vpop.f32.mrb[0].mxu0
        %1033 = vmatprep.mubr.f32.mxu0 0.0
        %1034 = vmatmul.mubr.f32.gmra.mrb[0].mxu0 %v778
        %v1035 = vpop.f32.mrb[0].mxu0
        %v1036 = vadd.f32 %v837, %v1035
        %v1037 = vpop.f32.mrb[0].mxu0
        %1038 = vmatprep.mubr.f32.mxu0 0.0
        %1039 = vmatmul.mubr.f32.gmra.mrb[0].mxu0 %v779
        %v1040 = vpop.f32.mrb[0].mxu0
        %v1041 = vadd.f32 %v837, %v1040
        %v1042 = vpop.f32.mrb[0].mxu0
        %1043 = vmatprep.mubr.f32.mxu0 0.0
        %1044 = vmatmul.mubr.f32.gmra.mrb[0].mxu0 %v780
        %v1045 = vpop.f32.mrb[0].mxu0
        %v1046 = vadd.f32 %v837, %v1045
        %v1047 = vpop.f32.mrb[0].mxu0
        %1048 = vmatprep.mubr.f32.mxu0 0.0
        %1049 = vmatmul.mubr.f32.gmra.mrb[0].mxu0 %v781
        %v1050 = vpop.f32.mrb[0].mxu0
        %v1051 = vadd.f32 %v837, %v1050
        %v1052 = vpop.f32.mrb[0].mxu0
        %1053 = vmatprep.mubr.f32.mxu0 0.0
        %1054 = vmatmul.mubr.f32.gmra.mrb[0].mxu0 %v782
        %v1055 = vpop.f32.mrb[0].mxu0
        %v1056 = vadd.f32 %v837, %v1055
        %v1057 = vpop.f32.mrb[0].mxu0
        %1058 = vmatprep.mubr.f32.mxu0 0.0
        %1059 = vmatmul.mubr.f32.gmra.mrb[0].mxu0 %v783
        %v1060 = vpop.f32.mrb[0].mxu0
        %v1061 = vadd.f32 %v837, %v1060
        %v1062 = vpop.f32.mrb[0].mxu0
        %1063 = vmatprep.mubr.f32.mxu0 0.0
        %1064 = vmatmul.mubr.f32.gmra.mrb[0].mxu0 %v784
        %v1065 = vpop.f32.mrb[0].mxu0
        %v1066 = vadd.f32 %v837, %v1065
        %v1067 = vpop.f32.mrb[0].mxu0
        %1068 = vmatprep.mubr.f32.mxu0 0.0
        %1069 = vmatmul.mubr.f32.gmra.mrb[0].mxu0 %v785
        %v1070 = vpop.f32.mrb[0].mxu0
        %v1071 = vadd.f32 %v837, %v1070
        %v1072 = vpop.f32.mrb[0].mxu0
        %1073 = vmatprep.mubr.f32.mxu0 0.0
        %1074 = vmatmul.mubr.f32.gmra.mrb[0].mxu0 %v786
        %v1075 = vpop.f32.mrb[0].mxu0
        %v1076 = vadd.f32 %v837, %v1075
        %v1077 = vpop.f32.mrb[0].mxu0
        %1078 = vmatprep.mubr.f32.mxu0 0.0
        %1079 = vmatmul.mubr.f32.gmra.mrb[0].mxu0 %v787
        %v1080 = vpop.f32.mrb[0].mxu0
        %v1081 = vadd.f32 %v837, %v1080
        %v1082 = vpop.f32.mrb[0].mxu0
        %1083 = vmatprep.mubr.f32.mxu0 0.0
        %1084 = vmatmul.mubr.f32.gmra.mrb[0].mxu0 %v788
        %v1085 = vpop.f32.mrb[0].mxu0
        %v1086 = vadd.f32 %v837, %v1085
        %v1087 = vpop.f32.mrb[0].mxu0
        %1088 = vmatprep.mubr.f32.mxu0 0.0
        %1089 = vmatmul.mubr.f32.gmra.mrb[0].mxu0 %v789
        %v1090 = vpop.f32.mrb[0].mxu0
        %v1091 = vadd.f32 %v837, %v1090
        %v1092 = vpop.f32.mrb[0].mxu0
        %1093 = vmatprep.mubr.f32.mxu0 0.0
        %1094 = vmatmul.mubr.f32.gmra.mrb[0].mxu0 %v790
        %v1095 = vpop.f32.mrb[0].mxu0
        %v1096 = vadd.f32 %v837, %v1095
        %v1097 = vpop.f32.mrb[0].mxu0
        %1098 = vmatprep.mubr.f32.mxu0 0.0
        %1099 = vmatmul.mubr.f32.gmra.mrb[0].mxu0 %v791
        %v1100 = vpop.f32.mrb[0].mxu0
        %v1101 = vadd.f32 %v837, %v1100
        %v1102 = vpop.f32.mrb[0].mxu0
        %1103 = vmatprep.mubr.f32.mxu0 0.0
        %1104 = vmatmul.mubr.f32.gmra.mrb[0].mxu0 %v792
        %v1105 = vpop.f32.mrb[0].mxu0
        %v1106 = vadd.f32 %v837, %v1105
        %v1107 = vpop.f32.mrb[0].mxu0
        %1108 = vmatprep.mubr.f32.mxu0 0.0
        %1109 = vmatmul.mubr.f32.gmra.mrb[0].mxu0 %v793
        %v1110 = vpop.f32.mrb[0].mxu0
        %v1111 = vadd.f32 %v837, %v1110
        %v1112 = vpop.f32.mrb[0].mxu0
        %1113 = vmatprep.mubr.f32.mxu0 0.0
        %1114 = vmatmul.mubr.f32.gmra.mrb[0].mxu0 %v794
        %v1115 = vpop.f32.mrb[0].mxu0
        %v1116 = vadd.f32 %v837, %v1115
        %v1117 = vpop.f32.mrb[0].mxu0
        %1118 = vmatprep.mubr.f32.mxu0 0.0
        %1119 = vmatmul.mubr.f32.gmra.mrb[0].mxu0 %v795
        %v1120 = vpop.f32.mrb[0].mxu0
        %v1121 = vadd.f32 %v837, %v1120
        %v1122 = vpop.f32.mrb[0].mxu0
        %1123 = vmatprep.mubr.f32.mxu0 0.0
        %1124 = vmatmul.mubr.f32.gmra.mrb[0].mxu0 %v796
        %v1125 = vpop.f32.mrb[0].mxu0
        %v1126 = vadd.f32 %v837, %v1125
        %v1127 = vpop.f32.mrb[0].mxu0
        %1128 = vmatprep.mubr.f32.mxu0 0.0
        %1129 = vmatmul.mubr.f32.gmra.mrb[0].mxu0 %v797
        %v1130 = vpop.f32.mrb[0].mxu0
        %v1131 = vadd.f32 %v837, %v1130
        %v1132 = vpop.f32.mrb[0].mxu0
        %1133 = vmatprep.mubr.f32.mxu0 0.0
        %1134 = vmatmul.mubr.f32.gmra.mrb[0].mxu0 %v798
        %v1135 = vpop.f32.mrb[0].mxu0
        %v1136 = vadd.f32 %v837, %v1135
        %v1137 = vpop.f32.mrb[0].mxu0
        %1138 = vmatprep.mubr.f32.mxu0 0.0
        %1139 = vmatmul.mubr.f32.gmra.mrb[0].mxu0 %v799
        %v1140 = vpop.f32.mrb[0].mxu0
        %v1141 = vadd.f32 %v837, %v1140
        %v1142 = vpop.f32.mrb[0].mxu0
        %1143 = vmatprep.mubr.f32.mxu0 0.0
        %1144 = vmatmul.mubr.f32.gmra.mrb[0].mxu0 %v800
        %v1145 = vpop.f32.mrb[0].mxu0
        %v1146 = vadd.f32 %v837, %v1145
        %v1147 = vpop.f32.mrb[0].mxu0
        %1148 = vmatprep.mubr.f32.mxu0 0.0
        %1149 = vmatmul.mubr.f32.gmra.mrb[0].mxu0 %v801
        %v1150 = vpop.f32.mrb[0].mxu0
        %v1151 = vadd.f32 %v837, %v1150
        %v1152 = vpop.f32.mrb[0].mxu0
        %1153 = vmatprep.mubr.f32.mxu0 0.0
        %1154 = vmatmul.mubr.f32.gmra.mrb[0].mxu0 %v802
        %v1155 = vpop.f32.mrb[0].mxu0
        %v1156 = vadd.f32 %v837, %v1155
        %v1157 = vpop.f32.mrb[0].mxu0
        %1158 = vmatprep.mubr.f32.mxu0 0.0
        %1159 = vmatmul.mubr.f32.gmra.mrb[0].mxu0 %v803
        %v1160 = vpop.f32.mrb[0].mxu0
        %v1161 = vadd.f32 %v837, %v1160
        %v1162 = vpop.f32.mrb[0].mxu0
        %1163 = vmatprep.mubr.f32.mxu0 0.0
        %1164 = vmatmul.mubr.f32.gmra.mrb[0].mxu0 %v804
        %v1165 = vpop.f32.mrb[0].mxu0
        %v1166 = vadd.f32 %v837, %v1165
        %v1167 = vpop.f32.mrb[0].mxu0
        %1168 = vmatprep.mubr.f32.mxu0 0.0
        %1169 = vmatmul.mubr.f32.gmra.mrb[0].mxu0 %v805
        %v1170 = vpop.f32.mrb[0].mxu0
        %v1171 = vadd.f32 %v837, %v1170
        %v1172 = vpop.f32.mrb[0].mxu0
        %1173 = vmatprep.mubr.f32.mxu0 0.0
        %1174 = vmatmul.mubr.f32.gmra.mrb[0].mxu0 %v806
        %v1175 = vpop.f32.mrb[0].mxu0
        %v1176 = vadd.f32 %v837, %v1175
        %v1177 = vpop.f32.mrb[0].mxu0
        %1178 = vmatprep.mubr.f32.mxu0 0.0
        %1179 = vmatmul.mubr.f32.gmra.mrb[0].mxu0 %v807
        %v1180 = vpop.f32.mrb[0].mxu0
        %v1181 = vadd.f32 %v837, %v1180
        %v1182 = vpop.f32.mrb[0].mxu0
        %1183 = vmatprep.mubr.f32.mxu0 0.0
        %1184 = vmatmul.mubr.f32.gmra.mrb[0].mxu0 %v808
        %v1185 = vpop.f32.mrb[0].mxu0
        %v1186 = vadd.f32 %v837, %v1185
        %v1187 = vpop.f32.mrb[0].mxu0
        %1188 = vmatprep.mubr.f32.mxu0 0.0
        %1189 = vmatmul.mubr.f32.gmra.mrb[0].mxu0 %v809
        %v1190 = vpop.f32.mrb[0].mxu0
        %v1191 = vadd.f32 %v837, %v1190
        %v1192 = vpop.f32.mrb[0].mxu0
        %1193 = vmatprep.mubr.f32.mxu0 0.0
        %1194 = vmatmul.mubr.f32.gmra.mrb[0].mxu0 %v810
        %v1195 = vpop.f32.mrb[0].mxu0
        %v1196 = vadd.f32 %v837, %v1195
        %v1197 = vpop.f32.mrb[0].mxu0
        %1198 = vmatprep.mubr.f32.mxu0 0.0
        %1199 = vmatmul.mubr.f32.gmra.mrb[0].mxu0 %v811
        %v1200 = vpop.f32.mrb[0].mxu0
        %v1201 = vadd.f32 %v837, %v1200
        %v1202 = vpop.f32.mrb[0].mxu0
        %1203 = vmatprep.mubr.f32.mxu0 0.0
        %1204 = vmatmul.mubr.f32.gmra.mrb[0].mxu0 %v812
        %v1205 = vpop.f32.mrb[0].mxu0
        %v1206 = vadd.f32 %v837, %v1205
        %v1207 = vpop.f32.mrb[0].mxu0
        %1208 = vmatprep.mubr.f32.mxu0 0.0
        %1209 = vmatmul.mubr.f32.gmra.mrb[0].mxu0 %v813
        %v1210 = vpop.f32.mrb[0].mxu0
        %v1211 = vadd.f32 %v837, %v1210
        %v1212 = vpop.f32.mrb[0].mxu0
        %1213 = vmatprep.mubr.f32.mxu0 0.0
        %1214 = vmatmul.mubr.f32.gmra.mrb[0].mxu0 %v814
        %v1215 = vpop.f32.mrb[0].mxu0
        %v1216 = vadd.f32 %v837, %v1215
        %v1217 = vpop.f32.mrb[0].mxu0
        %1218 = vmatprep.mubr.f32.mxu0 0.0
        %1219 = vmatmul.mubr.f32.gmra.mrb[0].mxu0 %v815
        %v1220 = vpop.f32.mrb[0].mxu0
        %v1221 = vadd.f32 %v837, %v1220
        %v1222 = vpop.f32.mrb[0].mxu0
        %1223 = vdwg.mxu0
        %v1224 = vmax.f32 %v906, 0.0
        %v1225 = vmax.f32 %v911, 0.0
        %v1226 = vmax.f32 %v916, 0.0
        %v1227 = vmax.f32 %v921, 0.0
        %v1228 = vmax.f32 %v926, 0.0
        %v1229 = vmax.f32 %v931, 0.0
        %v1230 = vmax.f32 %v936, 0.0
        %v1231 = vmax.f32 %v941, 0.0
        %v1232 = vmax.f32 %v946, 0.0
        %v1233 = vmax.f32 %v951, 0.0
        %v1234 = vmax.f32 %v956, 0.0
        %v1235 = vmax.f32 %v961, 0.0
        %v1236 = vmax.f32 %v966, 0.0
        %v1237 = vmax.f32 %v971, 0.0
        %v1238 = vmax.f32 %v976, 0.0
        %v1239 = vmax.f32 %v981, 0.0
        %v1240 = vmax.f32 %v986, 0.0
        %v1241 = vmax.f32 %v991, 0.0
        %v1242 = vmax.f32 %v996, 0.0
        %v1243 = vmax.f32 %v1001, 0.0
        %v1244 = vmax.f32 %v1006, 0.0
        %v1245 = vmax.f32 %v1011, 0.0
        %v1246 = vmax.f32 %v1016, 0.0
        %v1247 = vmax.f32 %v1021, 0.0
        %v1248 = vmax.f32 %v1026, 0.0
        %v1249 = vmax.f32 %v1031, 0.0
        %v1250 = vmax.f32 %v1036, 0.0
        %v1251 = vmax.f32 %v1041, 0.0
        %v1252 = vmax.f32 %v1046, 0.0
        %v1253 = vmax.f32 %v1051, 0.0
        %v1254 = vmax.f32 %v1056, 0.0
        %v1255 = vmax.f32 %v1061, 0.0
        %v1256 = vmax.f32 %v1066, 0.0
        %v1257 = vmax.f32 %v1071, 0.0
        %v1258 = vmax.f32 %v1076, 0.0
        %v1259 = vmax.f32 %v1081, 0.0
        %v1260 = vmax.f32 %v1086, 0.0
        %v1261 = vmax.f32 %v1091, 0.0
        %v1262 = vmax.f32 %v1096, 0.0
        %v1263 = vmax.f32 %v1101, 0.0
        %v1264 = vmax.f32 %v1106, 0.0
        %v1265 = vmax.f32 %v1111, 0.0
        %v1266 = vmax.f32 %v1116, 0.0
        %v1267 = vmax.f32 %v1121, 0.0
        %v1268 = vmax.f32 %v1126, 0.0
        %v1269 = vmax.f32 %v1131, 0.0
        %v1270 = vmax.f32 %v1136, 0.0
        %v1271 = vmax.f32 %v1141, 0.0
        %v1272 = vmax.f32 %v1146, 0.0
        %v1273 = vmax.f32 %v1151, 0.0
        %v1274 = vmax.f32 %v1156, 0.0
        %v1275 = vmax.f32 %v1161, 0.0
        %v1276 = vmax.f32 %v1166, 0.0
        %v1277 = vmax.f32 %v1171, 0.0
        %v1278 = vmax.f32 %v1176, 0.0
        %v1279 = vmax.f32 %v1181, 0.0
        %v1280 = vmax.f32 %v1186, 0.0
        %v1281 = vmax.f32 %v1191, 0.0
        %v1282 = vmax.f32 %v1196, 0.0
        %v1283 = vmax.f32 %v1201, 0.0
        %v1284 = vmax.f32 %v1206, 0.0
        %v1285 = vmax.f32 %v1211, 0.0
        %v1286 = vmax.f32 %v1216, 0.0
        %v1287 = vmax.f32 %v1221, 0.0
        %v1288 = vld [vmem:[%s5] sm:$0x1]
        %s1289 = sld [smem:[#allocation2]]
        %v1290 = vstv %s1289
        %1291 = vmatprep.subr.mxu0 0.0
        %1292 = vmatpush1.xpose.msra.mxu0 %v1224
        %1293 = vmatprep.subr.mxu0 0.0
        %1294 = vmatpush1.xpose.msra.mxu0 %v1225
        %1295 = vmatprep.subr.mxu0 0.0
        %1296 = vmatpush1.xpose.msra.mxu0 %v1226
        %1297 = vmatprep.subr.mxu0 0.0
        %1298 = vmatpush1.xpose.msra.mxu0 %v1227
        %1299 = vmatprep.subr.mxu0 0.0
        %1300 = vmatpush1.xpose.msra.mxu0 %v1228
        %1301 = vmatprep.subr.mxu0 0.0
        %1302 = vmatpush1.xpose.msra.mxu0 %v1229
        %1303 = vmatprep.subr.mxu0 0.0
        %1304 = vmatpush1.xpose.msra.mxu0 %v1230
        %1305 = vmatprep.subr.mxu0 0.0
        %1306 = vmatpush1.xpose.msra.mxu0 %v1231
        %1307 = vmatprep.subr.mxu0 0.0
        %1308 = vmatpush1.xpose.msra.mxu0 %v1232
        %1309 = vmatprep.subr.mxu0 0.0
        %1310 = vmatpush1.xpose.msra.mxu0 %v1233
        %1311 = vmatprep.subr.mxu0 0.0
        %1312 = vmatpush1.xpose.msra.mxu0 %v1234
        %1313 = vmatprep.subr.mxu0 0.0
        %1314 = vmatpush1.xpose.msra.mxu0 %v1235
        %1315 = vmatprep.subr.mxu0 0.0
        %1316 = vmatpush1.xpose.msra.mxu0 %v1236
        %1317 = vmatprep.subr.mxu0 0.0
        %1318 = vmatpush1.xpose.msra.mxu0 %v1237
        %1319 = vmatprep.subr.mxu0 0.0
        %1320 = vmatpush1.xpose.msra.mxu0 %v1238
        %1321 = vmatprep.subr.mxu0 0.0
        %1322 = vmatpush1.xpose.msra.mxu0 %v1239
        %1323 = vmatprep.subr.mxu0 0.0
        %1324 = vmatpush1.xpose.msra.mxu0 %v1240
        %1325 = vmatprep.subr.mxu0 0.0
        %1326 = vmatpush1.xpose.msra.mxu0 %v1241
        %1327 = vmatprep.subr.mxu0 0.0
        %1328 = vmatpush1.xpose.msra.mxu0 %v1242
        %1329 = vmatprep.subr.mxu0 0.0
        %1330 = vmatpush1.xpose.msra.mxu0 %v1243
        %1331 = vmatprep.subr.mxu0 0.0
        %1332 = vmatpush1.xpose.msra.mxu0 %v1244
        %1333 = vmatprep.subr.mxu0 0.0
        %1334 = vmatpush1.xpose.msra.mxu0 %v1245
        %1335 = vmatprep.subr.mxu0 0.0
        %1336 = vmatpush1.xpose.msra.mxu0 %v1246
        %1337 = vmatprep.subr.mxu0 0.0
        %1338 = vmatpush1.xpose.msra.mxu0 %v1247
        %1339 = vmatprep.subr.mxu0 0.0
        %1340 = vmatpush1.xpose.msra.mxu0 %v1248
        %1341 = vmatprep.subr.mxu0 0.0
        %1342 = vmatpush1.xpose.msra.mxu0 %v1249
        %1343 = vmatprep.subr.mxu0 0.0
        %1344 = vmatpush1.xpose.msra.mxu0 %v1250
        %1345 = vmatprep.subr.mxu0 0.0
        %1346 = vmatpush1.xpose.msra.mxu0 %v1251
        %1347 = vmatprep.subr.mxu0 0.0
        %1348 = vmatpush1.xpose.msra.mxu0 %v1252
        %1349 = vmatprep.subr.mxu0 0.0
        %1350 = vmatpush1.xpose.msra.mxu0 %v1253
        %1351 = vmatprep.subr.mxu0 0.0
        %1352 = vmatpush1.xpose.msra.mxu0 %v1254
        %1353 = vmatprep.subr.mxu0 0.0
        %1354 = vmatpush1.xpose.msra.mxu0 %v1255
        %1355 = vmatprep.mubr.f32.mxu0 0.0
        %1356 = vmatmul.mubr.f32.gmra.mrb[0].mxu0 %v1288
        %v1357 = vpop.f32.mrb[0].mxu0
        %v1358 = vadd.f32 %v1290, %v1357
        %v1359 = vpop.f32.mrb[0].mxu0
        %v1360 = vadd.f32 %v1290, %v1359
        %1361 = vdwg.mxu0
        %1362 = vmatprep.subr.mxu0 0.0
        %1363 = vmatpush1.xpose.msra.mxu0 %v1256
        %1364 = vmatprep.subr.mxu0 0.0
        %1365 = vmatpush1.xpose.msra.mxu0 %v1257
        %1366 = vmatprep.subr.mxu0 0.0
        %1367 = vmatpush1.xpose.msra.mxu0 %v1258
        %1368 = vmatprep.subr.mxu0 0.0
        %1369 = vmatpush1.xpose.msra.mxu0 %v1259
        %1370 = vmatprep.subr.mxu0 0.0
        %1371 = vmatpush1.xpose.msra.mxu0 %v1260
        %1372 = vmatprep.subr.mxu0 0.0
        %1373 = vmatpush1.xpose.msra.mxu0 %v1261
        %1374 = vmatprep.subr.mxu0 0.0
        %1375 = vmatpush1.xpose.msra.mxu0 %v1262
        %1376 = vmatprep.subr.mxu0 0.0
        %1377 = vmatpush1.xpose.msra.mxu0 %v1263
        %1378 = vmatprep.subr.mxu0 0.0
        %1379 = vmatpush1.xpose.msra.mxu0 %v1264
        %1380 = vmatprep.subr.mxu0 0.0
        %1381 = vmatpush1.xpose.msra.mxu0 %v1265
        %1382 = vmatprep.subr.mxu0 0.0
        %1383 = vmatpush1.xpose.msra.mxu0 %v1266
        %1384 = vmatprep.subr.mxu0 0.0
        %1385 = vmatpush1.xpose.msra.mxu0 %v1267
        %1386 = vmatprep.subr.mxu0 0.0
        %1387 = vmatpush1.xpose.msra.mxu0 %v1268
        %1388 = vmatprep.subr.mxu0 0.0
        %1389 = vmatpush1.xpose.msra.mxu0 %v1269
        %1390 = vmatprep.subr.mxu0 0.0
        %1391 = vmatpush1.xpose.msra.mxu0 %v1270
        %1392 = vmatprep.subr.mxu0 0.0
        %1393 = vmatpush1.xpose.msra.mxu0 %v1271
        %1394 = vmatprep.subr.mxu0 0.0
        %1395 = vmatpush1.xpose.msra.mxu0 %v1272
        %1396 = vmatprep.subr.mxu0 0.0
        %1397 = vmatpush1.xpose.msra.mxu0 %v1273
        %1398 = vmatprep.subr.mxu0 0.0
        %1399 = vmatpush1.xpose.msra.mxu0 %v1274
        %1400 = vmatprep.subr.mxu0 0.0
        %1401 = vmatpush1.xpose.msra.mxu0 %v1275
        %1402 = vmatprep.subr.mxu0 0.0
        %1403 = vmatpush1.xpose.msra.mxu0 %v1276
        %1404 = vmatprep.subr.mxu0 0.0
        %1405 = vmatpush1.xpose.msra.mxu0 %v1277
        %1406 = vmatprep.subr.mxu0 0.0
        %1407 = vmatpush1.xpose.msra.mxu0 %v1278
        %1408 = vmatprep.subr.mxu0 0.0
        %1409 = vmatpush1.xpose.msra.mxu0 %v1279
        %1410 = vmatprep.subr.mxu0 0.0
        %1411 = vmatpush1.xpose.msra.mxu0 %v1280
        %1412 = vmatprep.subr.mxu0 0.0
        %1413 = vmatpush1.xpose.msra.mxu0 %v1281
        %1414 = vmatprep.subr.mxu0 0.0
        %1415 = vmatpush1.xpose.msra.mxu0 %v1282
        %1416 = vmatprep.subr.mxu0 0.0
        %1417 = vmatpush1.xpose.msra.mxu0 %v1283
        %1418 = vmatprep.subr.mxu0 0.0
        %1419 = vmatpush1.xpose.msra.mxu0 %v1284
        %1420 = vmatprep.subr.mxu0 0.0
        %1421 = vmatpush1.xpose.msra.mxu0 %v1285
        %1422 = vmatprep.subr.mxu0 0.0
        %1423 = vmatpush1.xpose.msra.mxu0 %v1286
        %1424 = vmatprep.subr.mxu0 0.0
        %1425 = vmatpush1.xpose.msra.mxu0 %v1287
        %1426 = vmatprep.mubr.f32.mxu0 0.0
        %1427 = vmatmul.mubr.f32.gmra.mrb[0].mxu0 %v1288
        %v1428 = vpop.f32.mrb[0].mxu0
        %v1429 = vadd.f32 %v1290, %v1428
        %v1430 = vpop.f32.mrb[0].mxu0
        %v1431 = vadd.f32 %v1290, %v1430
        %1432 = vdwg.mxu0
        %v1433 = vxor.u32 %v1358, 2147483648
        %v1434 = vxor.u32 %v1360, 2147483648
        %v1435 = vxor.u32 %v1429, 2147483648
        %v1436 = vxor.u32 %v1431, 2147483648
        %v1437 = vmul.f32 %v1433, 1.442695
        %v1438 = vpow.pop %v1437
        %v1439 = vmul.f32 %v1434, 1.442695
        %v1440 = vpow.pop %v1439
        %v1441 = vmul.f32 %v1435, 1.442695
        %v1442 = vpow.pop %v1441
        %v1443 = vmul.f32 %v1436, 1.442695
        %v1444 = vpow.pop %v1443
        %v1445 = vadd.f32 %v1438, 1.0
        %v1446 = vadd.f32 %v1440, 1.0
        %v1447 = vadd.f32 %v1442, 1.0
        %v1448 = vadd.f32 %v1444, 1.0
        %v1449 = vrcp.pop %v1445
        %v1450 = vmul.f32 1.0, %v1449
        %v1451 = vrcp.pop %v1446
        %v1452 = vmul.f32 1.0, %v1451
        %v1453 = vrcp.pop %v1447
        %v1454 = vmul.f32 1.0, %v1453
        %v1455 = vrcp.pop %v1448
        %v1456 = vmul.f32 1.0, %v1455
        %v1461 = vcombine.low %v1450, %v1452
        %v1462 = vcombine.low %v1454, %v1456
        %v1464 = vunpack.c.l.s4 1966171168
        %v1465 = vunpack.c.0.s8 %v1464
        %v1466 = vlaneseq
        %v1467 = vshrl.u32 %v1466, 7
        %v1468 = vsub.s32 %v1465, %v1467
        %v1469 = vrot.slane %v1461, %v1468
        %v1471 = vunpack.c.l.s4 1966171168
        %v1472 = vunpack.c.0.s8 %v1471
        %v1473 = vlaneseq
        %v1474 = vshrl.u32 %v1473, 7
        %v1475 = vsub.s32 %v1472, %v1474
        %v1476 = vrot.slane %v1462, %v1475
        %v1477 = vcombine.low %v1469, %v1476
        %v1479 = vunpack.c.l.s4 1966171168
        %v1480 = vunpack.c.0.s8 %v1479
        %v1481 = vlaneseq
        %v1482 = vshrl.u32 %v1481, 7
        %v1483 = vsub.s32 %v1480, %v1482
        %v1484 = vrot.slane %v1477, %v1483
        %v1486 = vlaneseq
        %vm1487 = vcmp.ge.s32.totalorder %v1486, 0
        %vm1488 = vcmp.lt.s32.totalorder %v1486, 512
        %vm1489 = vmand %vm1487, %vm1488
        %1490 = vst.msk [vmem:[%s273] sm:$0xf] %vm1489, %v1484
        %s1491 = sand.u32 %s182, 1
        %s1492 = scalar_lea.sflag [#allocation4], %s1491
        %s1493 = sand.u32 %s182, 1
        %s1494 = smul.addr %s1493, 4
        %s1495 = scalar_lea.vmem [#allocation3], %s1494
        // Predicated region
        $region49: #{prior_discriminator.1} parent=47 // pred_check
          %p1496 = pneg %p192
        $region50: #{prior_discriminator.1} parent=47 // pred_check_branch
          %1498 = sbr.rel (%p1496) target = $region52
        $region51: #{prior_discriminator.1} parent=47 // pred_region
          %s1500 = ssub.s32 64, 64
          %1501 = vsyncadd %s1492, %s1500
          %s1502 = smul.addr %s22, 4
          %s1503 = smul.addr %s1502, 16
          %s1504 = scalar_lea.hbm %s7, %s1503
          %s1506 = sshll.u32 %s1495, 4
          %s1507 = int_to_ptr.vmem [resolvable:$true] %s1506
          %1509 = dma.vmem_to_hbm [thread:$0]  %s1507, 64, %s1504, %s1492
        $region52: #{prior_discriminator.1} parent=47 // pred_fallthru
          _
      $region48: #{prior_discriminator.1} parent=5 // pred_fallthru
        _
      %p1510 = scmp.le.s32.totalorder 2, %s17
      // Predicated region
      $region53: #{prior_discriminator.1} parent=5 // pred_check
        %p1511 = pneg %p1510
      $region54: #{prior_discriminator.1} parent=5 // pred_check_branch
        %1513 = sbr.rel (%p1511) target = $region56
      $region55: #{prior_discriminator.1} parent=5 // pred_region
        %s1514 = ssub.s32 %s17, 2
        // Predicated region
        $region57: #{prior_discriminator.1} parent=55 // pred_check
          %p1515 = pneg %p198
        $region58: #{prior_discriminator.1} parent=55 // pred_check_branch
          %1517 = sbr.rel (%p1515) target = $region60
        $region59: #{prior_discriminator.1} parent=55 // pred_region
          %s1518 = sand.u32 %s183, 1
          %s1519 = scalar_lea.sflag [#allocation4], %s1518
          %s1520 = sand.u32 %s183, 1
          %s1521 = smul.addr %s1520, 4
          %s1522 = scalar_lea.vmem [#allocation3], %s1521
          %1523 = dma.done %s1519, 64
        $region60: #{prior_discriminator.1} parent=55 // pred_fallthru
          _
      $region56: #{prior_discriminator.1} parent=5 // pred_fallthru
        _
    $region6: #{prior_discriminator.1} parent=1 // loop_footer
      %s21 = sadd.s32 1, %s17
    $region7: #{prior_discriminator.1} parent=1 // loop_footer_branch
      %16 = sbr.rel target = $region3
    $region8: #{prior_discriminator.1} parent=1 // loop_exit
      _
    %1524 = vsyncpa [#allocation4], 1
    %s1525 = scalar_lea.sflag [#allocation4], 1
    %1526 = vsyncpa %s1525, 1

</llo_original>
